<compile_context>
chip_gen: v6e
topology: v6e:2x2x1
jax: 0.10.0
libtpu: 0.0.40
codegen_flags: <defaults>
</compile_context>

<pallas_src>
import functools

import jax
import jax.numpy as jnp
import numpy as np
from jax.experimental import pallas as pl
from jax.experimental.pallas import tpu as pltpu

NUM_HEADS = 4


def fusion_kernel(x_ref, wqkv_ref, bqkv_ref, wo_ref, bo_ref, mask_ref, hmask_ref,
                  o_ref, *, num_features, out_rows):
    """One grid step = B_BLOCK packed batch elements.

    x_ref:     (R, H)  with R = F * B_BLOCK * N, rows ordered (feature, batch, n)
    mask_ref:  (R, R)  additive block-diagonal mask (0 within a sequence, -1e30 across)
    hmask_ref: (NUM_HEADS, H) 1.0 on the lanes that belong to each head
    o_ref:     (out_rows, H) with out_rows = B_BLOCK * N, rows ordered (batch, n)
    """
    F = num_features
    R, H = x_ref.shape

    x = x_ref[...]

    # ---- fused projection + q/k/v in-projection (+ folded query scale): one MXU pass --
    qkv = jnp.dot(x, wqkv_ref[...], preferred_element_type=jnp.float32) + bqkv_ref[...]
    q = qkv[:, 0 * H:1 * H]          # already scaled by 1/sqrt(head_dim) (wrapper fold)
    k = qkv[:, 1 * H:2 * H]
    v = qkv[:, 2 * H:3 * H]

    mask_bias = mask_ref[...]        # resident: built once in the wrapper
    hmask = hmask_ref[...]           # (NUM_HEADS, H)

    # Single k relayout, reused by every head (hoisted out of the head loop).
    kT = jnp.transpose(k)            # (H, R)

    # ---- multi-head attention via lane masking: no per-head slicing / concat ----------
    attn = jnp.zeros((R, H), jnp.float32)
    for h in range(NUM_HEADS):
        hm = hmask[h:h + 1, :]                                     # (1, H)
        qh = q * hm                                                # head-h lanes only
        s = jnp.dot(qh, kT, preferred_element_type=jnp.float32) + mask_bias
        s = s - jnp.max(s, axis=-1, keepdims=True)
        p = jnp.exp(s)
        p = p * pl.reciprocal(jnp.sum(p, axis=-1, keepdims=True), approx=True)
        vh = v * hm
        # p @ vh lands directly in head-h lanes of the (R, H) accumulator.
        attn = attn + jnp.dot(p, vh, preferred_element_type=jnp.float32)

    # ---- feature-mean BEFORE the out-projection (mean commutes with the Linear) -------
    # Sublane-aligned slab adds over the F contiguous (out_rows, H) feature slabs.
    mean = attn[0:out_rows, :]
    for f in range(1, F):
        mean = mean + attn[f * out_rows:(f + 1) * out_rows, :]
    mean = mean * (1.0 / F)                                        # (out_rows, H)

    out = jnp.dot(mean, wo_ref[...], preferred_element_type=jnp.float32) + bo_ref[...]
    o_ref[...] = out.astype(o_ref.dtype)


def fuse_params(params, H):
    """Fold projection Linear + q/k/v in-projection + query scaling into one (H, 3H)."""
    wp, bp, wq, bq, wk, bk, wv, bv, wo, bo = params
    hd = H // NUM_HEADS
    scale = 1.0 / float(np.sqrt(hd))

    wqkv = jnp.concatenate([wq, wk, wv], axis=1)           # (H, 3H)
    bqkv = jnp.concatenate([bq, bk, bv])                    # (3H,)
    # (x @ wp + bp) @ W + b  ==  x @ (wp @ W) + (bp @ W + b)
    hi = jax.lax.Precision.HIGHEST
    wqkv_f = jnp.dot(wp, wqkv, precision=hi)                # (H, 3H)
    bqkv_f = jnp.dot(bp, wqkv, precision=hi) + bqkv         # (3H,)
    # Fold the 1/sqrt(head_dim) query scaling into the Q columns.
    col_scale = jnp.concatenate([jnp.full((H,), scale, jnp.float32),
                                 jnp.ones((2 * H,), jnp.float32)])
    wqkv_f = wqkv_f * col_scale[None, :]
    bqkv_f = bqkv_f * col_scale
    return wqkv_f, bqkv_f.reshape(1, 3 * H), wo, bo.reshape(1, H)


def choose_batch_block(B, F, N, target_rows=128):
    """Pick B_BLOCK dividing B so one grid step has ~>=128 rows (MXU row fill)."""
    per_batch = F * N
    bb = min(B, max(1, -(-target_rows // per_batch)))       # ceil(target / per_batch)
    while B % bb:
        bb -= 1
    return bb


def fusion_forward(features, params, batch_block=None):
    """features: list of F arrays, each (B, H, N) — same layout as the PyTorch module."""
    F = len(features)
    B, H, N = features[0].shape
    bb = batch_block if batch_block is not None else choose_batch_block(B, F, N)
    num_blocks = B // bb
    R = F * bb * N            # activation rows per grid step
    out_rows = bb * N         # output rows per grid step

    # Glue (one stack + one transpose): list of (B,H,N) -> (num_blocks*R, H), rows
    # ordered (block, feature, batch-in-block, n).
    x = jnp.stack(features, axis=0)                          # (F, B, H, N)
    x = x.reshape(F, num_blocks, bb, H, N)
    x = jnp.transpose(x, (1, 0, 2, 4, 3))                    # (blk, F, bb, N, H)
    x = x.reshape(num_blocks * R, H)

    wqkv, bqkv, wo, bo = fuse_params(params, H)

    # Resident masks built once at trace time (hoisted out of the kernel body).
    rows = np.arange(R)
    mask_bias = jnp.asarray(
        np.where((rows[:, None] // N) == (rows[None, :] // N), 0.0, -1e30),
        jnp.float32)                                          # (R, R)
    lane_head = np.arange(H) // (H // NUM_HEADS)
    head_mask = jnp.asarray(
        (lane_head[None, :] == np.arange(NUM_HEADS)[:, None]).astype(np.float32))

    kernel = functools.partial(fusion_kernel, num_features=F, out_rows=out_rows)
    const = lambda g: (0, 0)

    out = pl.pallas_call(
        kernel,
        out_shape=jax.ShapeDtypeStruct((num_blocks * out_rows, H), jnp.float32),
        grid_spec=pltpu.PrefetchScalarGridSpec(
            num_scalar_prefetch=0,
            grid=(num_blocks,),
            in_specs=[
                pl.BlockSpec((R, H), lambda g: (g, 0)),       # packed activations
                pl.BlockSpec((H, 3 * H), const),               # fused W_qkv
                pl.BlockSpec((1, 3 * H), const),               # fused b_qkv
                pl.BlockSpec((H, H), const),                   # W_out
                pl.BlockSpec((1, H), const),                   # b_out
                pl.BlockSpec((R, R), const),                   # block-diagonal mask
                pl.BlockSpec((NUM_HEADS, H), const),           # per-head lane mask
            ],
            out_specs=pl.BlockSpec((out_rows, H), lambda g: (g, 0)),
        ),
        compiler_params=pltpu.CompilerParams(
            dimension_semantics=("parallel",)),
    )(x, wqkv, bqkv, wo, bo, mask_bias, head_mask)

    # (num_blocks*bb*N, H) -> (B, N, H) -> PyTorch output layout (B, H, N).
    return jnp.transpose(out.reshape(B, N, H), (0, 2, 1))


def fusion_reference(features, params):
    """Pure-JAX reference mirroring the PyTorch forward exactly (un-fused weights)."""
    wp, bp, wq, bq, wk, bk, wv, bv, wo, bo = params
    F = len(features)
    B, H, N = features[0].shape
    hd = H // NUM_HEADS
    scale = 1.0 / float(np.sqrt(hd))

    x = jnp.stack([jnp.transpose(f, (0, 2, 1)) for f in features], axis=1)  # (B,F,N,H)
    x = x.reshape(B * F, N, H)
    y = x @ wp + bp
    q = (y @ wq + bq).reshape(B * F, N, NUM_HEADS, hd)
    k = (y @ wk + bk).reshape(B * F, N, NUM_HEADS, hd)
    v = (y @ wv + bv).reshape(B * F, N, NUM_HEADS, hd)
    s = jnp.einsum("bqhd,bkhd->bhqk", q * scale, k)
    p = jax.nn.softmax(s, axis=-1)
    o = jnp.einsum("bhqk,bkhd->bqhd", p, v).reshape(B * F, N, H)
    o = o @ wo + bo
    o = o.reshape(B, F, N, H).mean(axis=1)
    return jnp.transpose(o, (0, 2, 1))  # (B, H, N)


def make_params(key, H):
    """Deterministic synthetic weights. All matrices stored pre-transposed (x @ W)."""
    ks = jax.random.split(key, 10)
    s = 0.1
    wp = s * jax.random.normal(ks[0], (H, H), jnp.float32)
    bp = s * jax.random.normal(ks[1], (H,), jnp.float32)
    wq = s * jax.random.normal(ks[2], (H, H), jnp.float32)
    bq = s * jax.random.normal(ks[3], (H,), jnp.float32)
    wk = s * jax.random.normal(ks[4], (H, H), jnp.float32)
    bk = s * jax.random.normal(ks[5], (H,), jnp.float32)
    wv = s * jax.random.normal(ks[6], (H, H), jnp.float32)
    bv = s * jax.random.normal(ks[7], (H,), jnp.float32)
    wo = s * jax.random.normal(ks[8], (H, H), jnp.float32)
    bo = s * jax.random.normal(ks[9], (H,), jnp.float32)
    return (wp, bp, wq, bq, wk, bk, wv, bv, wo, bo)


if __name__ == "__main__":
    B, H, N, F = 2, 32, 8, 3  # batch, hidden_dim, sequence length N, num features

    key = jax.random.PRNGKey(0)
    kf, kp = jax.random.split(key)
    feat_keys = jax.random.split(kf, F)
    features = [jax.random.normal(feat_keys[i], (B, H, N), jnp.float32)
                for i in range(F)]
    params = make_params(kp, H)

    out = fusion_forward(features, params)
    out = jax.block_until_ready(out)

    ref = fusion_reference(features, params)
    assert out.shape == (B, H, N), out.shape
    # Tolerance covers the EUP approximate-reciprocal softmax normalization and the
    # algebraic weight/mean folds (all well below 1e-3 at these magnitudes).
    np.testing.assert_allclose(np.asarray(out), np.asarray(ref), atol=1e-3, rtol=1e-3)

    print("KERNEL_OK")
</pallas_src>

<mosaic_0001>
module attributes {stable_mosaic.version = 11 : i64} {
  func.func @fusion_kernel(%arg0: i32, %arg1: memref<48x32xf32, #tpu.memory_space<vmem>>, %arg2: memref<32x96xf32, #tpu.memory_space<vmem>>, %arg3: memref<1x96xf32, #tpu.memory_space<vmem>>, %arg4: memref<32x32xf32, #tpu.memory_space<vmem>>, %arg5: memref<1x32xf32, #tpu.memory_space<vmem>>, %arg6: memref<48x48xf32, #tpu.memory_space<vmem>>, %arg7: memref<4x32xf32, #tpu.memory_space<vmem>>, %arg8: memref<16x32xf32, #tpu.memory_space<vmem>>) attributes {dimension_semantics = [#tpu.dimension_semantics<parallel>], iteration_bounds = array<i64: 1>, scalar_prefetch = 0 : i64, scratch_operands = 0 : i64, tpu.core_type = #tpu.core_type<tc>, window_params = [{transform_indices = @transform_0, window_bounds = array<i64: 48, 32>}, {pipeline_mode = #tpu.pipeline_mode<synchronous>, transform_indices = @transform_1, window_bounds = array<i64: 32, 96>}, {pipeline_mode = #tpu.pipeline_mode<synchronous>, transform_indices = @transform_2, window_bounds = array<i64: 1, 96>}, {pipeline_mode = #tpu.pipeline_mode<synchronous>, transform_indices = @transform_3, window_bounds = array<i64: 32, 32>}, {pipeline_mode = #tpu.pipeline_mode<synchronous>, transform_indices = @transform_4, window_bounds = array<i64: 1, 32>}, {pipeline_mode = #tpu.pipeline_mode<synchronous>, transform_indices = @transform_5, window_bounds = array<i64: 48, 48>}, {pipeline_mode = #tpu.pipeline_mode<synchronous>, transform_indices = @transform_6, window_bounds = array<i64: 4, 32>}, {transform_indices = @transform_7, window_bounds = array<i64: 16, 32>}]} {
    %c0 = arith.constant 0 : index
    %c0_0 = arith.constant 0 : index
    %0 = vector.load %arg1[%c0, %c0_0] : memref<48x32xf32, #tpu.memory_space<vmem>>, vector<48x32xf32>
    %c0_1 = arith.constant 0 : index
    %c0_2 = arith.constant 0 : index
    %1 = vector.load %arg2[%c0_1, %c0_2] : memref<32x96xf32, #tpu.memory_space<vmem>>, vector<32x96xf32>
    %cst = arith.constant dense<0.000000e+00> : vector<48x96xf32>
    %2 = tpu.matmul %0, %1, %cst {dimension_numbers = #tpu.dot_dimension_numbers<[1], [0], [0], [1], [0, 0, 1, 1], [], []>} : vector<48x32xf32>, vector<32x96xf32>, vector<48x96xf32> -> vector<48x96xf32>
    %c0_3 = arith.constant 0 : index
    %c0_4 = arith.constant 0 : index
    %3 = vector.load %arg3[%c0_3, %c0_4] : memref<1x96xf32, #tpu.memory_space<vmem>>, vector<1x96xf32>
    %4 = vector.broadcast %3 : vector<1x96xf32> to vector<48x96xf32>
    %5 = arith.addf %2, %4 : vector<48x96xf32>
    %6 = vector.extract_strided_slice %5 {offsets = [0, 0], sizes = [48, 32], strides = [1, 1]} : vector<48x96xf32> to vector<48x32xf32>
    %7 = vector.extract_strided_slice %5 {offsets = [0, 32], sizes = [48, 32], strides = [1, 1]} : vector<48x96xf32> to vector<48x32xf32>
    %8 = vector.extract_strided_slice %5 {offsets = [0, 64], sizes = [48, 32], strides = [1, 1]} : vector<48x96xf32> to vector<48x32xf32>
    %c0_5 = arith.constant 0 : index
    %c0_6 = arith.constant 0 : index
    %9 = vector.load %arg6[%c0_5, %c0_6] : memref<48x48xf32, #tpu.memory_space<vmem>>, vector<48x48xf32>
    %c0_7 = arith.constant 0 : index
    %c0_8 = arith.constant 0 : index
    %10 = vector.load %arg7[%c0_7, %c0_8] : memref<4x32xf32, #tpu.memory_space<vmem>>, vector<4x32xf32>
    %11 = tpu.transpose %7, [1, 0] : vector<48x32xf32> -> vector<32x48xf32>
    %cst_9 = arith.constant 0.000000e+00 : f32
    %12 = vector.broadcast %cst_9 : f32 to vector<48x32xf32>
    %13 = vector.extract_strided_slice %10 {offsets = [0, 0], sizes = [1, 32], strides = [1, 1]} : vector<4x32xf32> to vector<1x32xf32>
    %14 = vector.broadcast %13 : vector<1x32xf32> to vector<48x32xf32>
    %15 = arith.mulf %6, %14 : vector<48x32xf32>
    %cst_10 = arith.constant dense<0.000000e+00> : vector<48x48xf32>
    %16 = tpu.matmul %15, %11, %cst_10 {dimension_numbers = #tpu.dot_dimension_numbers<[1], [0], [0], [1], [0, 0, 1, 1], [], []>} : vector<48x32xf32>, vector<32x48xf32>, vector<48x48xf32> -> vector<48x48xf32>
    %17 = arith.addf %16, %9 : vector<48x48xf32>
    %cst_11 = arith.constant dense<0xFF800000> : vector<48xf32>
    %18 = vector.multi_reduction <maximumf>, %17, %cst_11 [1] : vector<48x48xf32> to vector<48xf32>
    %19 = vector.shape_cast %18 : vector<48xf32> to vector<48x1xf32>
    %20 = vector.broadcast %19 : vector<48x1xf32> to vector<48x48xf32>
    %21 = arith.subf %17, %20 : vector<48x48xf32>
    %22 = math.exp %21 : vector<48x48xf32>
    %cst_12 = arith.constant dense<0.000000e+00> : vector<48xf32>
    %23 = vector.multi_reduction <add>, %22, %cst_12 [1] : vector<48x48xf32> to vector<48xf32>
    %24 = vector.shape_cast %23 : vector<48xf32> to vector<48x1xf32>
    %25 = tpu.reciprocal %24 {approx = true} : vector<48x1xf32> -> vector<48x1xf32>
    %26 = vector.broadcast %25 : vector<48x1xf32> to vector<48x48xf32>
    %27 = arith.mulf %22, %26 : vector<48x48xf32>
    %28 = vector.broadcast %13 : vector<1x32xf32> to vector<48x32xf32>
    %29 = arith.mulf %8, %28 : vector<48x32xf32>
    %cst_13 = arith.constant dense<0.000000e+00> : vector<48x32xf32>
    %30 = tpu.matmul %27, %29, %cst_13 {dimension_numbers = #tpu.dot_dimension_numbers<[1], [0], [0], [1], [0, 0, 1, 1], [], []>} : vector<48x48xf32>, vector<48x32xf32>, vector<48x32xf32> -> vector<48x32xf32>
    %31 = arith.addf %12, %30 : vector<48x32xf32>
    %32 = vector.extract_strided_slice %10 {offsets = [1, 0], sizes = [1, 32], strides = [1, 1]} : vector<4x32xf32> to vector<1x32xf32>
    %33 = vector.broadcast %32 : vector<1x32xf32> to vector<48x32xf32>
    %34 = arith.mulf %6, %33 : vector<48x32xf32>
    %cst_14 = arith.constant dense<0.000000e+00> : vector<48x48xf32>
    %35 = tpu.matmul %34, %11, %cst_14 {dimension_numbers = #tpu.dot_dimension_numbers<[1], [0], [0], [1], [0, 0, 1, 1], [], []>} : vector<48x32xf32>, vector<32x48xf32>, vector<48x48xf32> -> vector<48x48xf32>
    %36 = arith.addf %35, %9 : vector<48x48xf32>
    %cst_15 = arith.constant dense<0xFF800000> : vector<48xf32>
    %37 = vector.multi_reduction <maximumf>, %36, %cst_15 [1] : vector<48x48xf32> to vector<48xf32>
    %38 = vector.shape_cast %37 : vector<48xf32> to vector<48x1xf32>
    %39 = vector.broadcast %38 : vector<48x1xf32> to vector<48x48xf32>
    %40 = arith.subf %36, %39 : vector<48x48xf32>
    %41 = math.exp %40 : vector<48x48xf32>
    %cst_16 = arith.constant dense<0.000000e+00> : vector<48xf32>
    %42 = vector.multi_reduction <add>, %41, %cst_16 [1] : vector<48x48xf32> to vector<48xf32>
    %43 = vector.shape_cast %42 : vector<48xf32> to vector<48x1xf32>
    %44 = tpu.reciprocal %43 {approx = true} : vector<48x1xf32> -> vector<48x1xf32>
    %45 = vector.broadcast %44 : vector<48x1xf32> to vector<48x48xf32>
    %46 = arith.mulf %41, %45 : vector<48x48xf32>
    %47 = vector.broadcast %32 : vector<1x32xf32> to vector<48x32xf32>
    %48 = arith.mulf %8, %47 : vector<48x32xf32>
    %cst_17 = arith.constant dense<0.000000e+00> : vector<48x32xf32>
    %49 = tpu.matmul %46, %48, %cst_17 {dimension_numbers = #tpu.dot_dimension_numbers<[1], [0], [0], [1], [0, 0, 1, 1], [], []>} : vector<48x48xf32>, vector<48x32xf32>, vector<48x32xf32> -> vector<48x32xf32>
    %50 = arith.addf %31, %49 : vector<48x32xf32>
    %51 = vector.extract_strided_slice %10 {offsets = [2, 0], sizes = [1, 32], strides = [1, 1]} : vector<4x32xf32> to vector<1x32xf32>
    %52 = vector.broadcast %51 : vector<1x32xf32> to vector<48x32xf32>
    %53 = arith.mulf %6, %52 : vector<48x32xf32>
    %cst_18 = arith.constant dense<0.000000e+00> : vector<48x48xf32>
    %54 = tpu.matmul %53, %11, %cst_18 {dimension_numbers = #tpu.dot_dimension_numbers<[1], [0], [0], [1], [0, 0, 1, 1], [], []>} : vector<48x32xf32>, vector<32x48xf32>, vector<48x48xf32> -> vector<48x48xf32>
    %55 = arith.addf %54, %9 : vector<48x48xf32>
    %cst_19 = arith.constant dense<0xFF800000> : vector<48xf32>
    %56 = vector.multi_reduction <maximumf>, %55, %cst_19 [1] : vector<48x48xf32> to vector<48xf32>
    %57 = vector.shape_cast %56 : vector<48xf32> to vector<48x1xf32>
    %58 = vector.broadcast %57 : vector<48x1xf32> to vector<48x48xf32>
    %59 = arith.subf %55, %58 : vector<48x48xf32>
    %60 = math.exp %59 : vector<48x48xf32>
    %cst_20 = arith.constant dense<0.000000e+00> : vector<48xf32>
    %61 = vector.multi_reduction <add>, %60, %cst_20 [1] : vector<48x48xf32> to vector<48xf32>
    %62 = vector.shape_cast %61 : vector<48xf32> to vector<48x1xf32>
    %63 = tpu.reciprocal %62 {approx = true} : vector<48x1xf32> -> vector<48x1xf32>
    %64 = vector.broadcast %63 : vector<48x1xf32> to vector<48x48xf32>
    %65 = arith.mulf %60, %64 : vector<48x48xf32>
    %66 = vector.broadcast %51 : vector<1x32xf32> to vector<48x32xf32>
    %67 = arith.mulf %8, %66 : vector<48x32xf32>
    %cst_21 = arith.constant dense<0.000000e+00> : vector<48x32xf32>
    %68 = tpu.matmul %65, %67, %cst_21 {dimension_numbers = #tpu.dot_dimension_numbers<[1], [0], [0], [1], [0, 0, 1, 1], [], []>} : vector<48x48xf32>, vector<48x32xf32>, vector<48x32xf32> -> vector<48x32xf32>
    %69 = arith.addf %50, %68 : vector<48x32xf32>
    %70 = vector.extract_strided_slice %10 {offsets = [3, 0], sizes = [1, 32], strides = [1, 1]} : vector<4x32xf32> to vector<1x32xf32>
    %71 = vector.broadcast %70 : vector<1x32xf32> to vector<48x32xf32>
    %72 = arith.mulf %6, %71 : vector<48x32xf32>
    %cst_22 = arith.constant dense<0.000000e+00> : vector<48x48xf32>
    %73 = tpu.matmul %72, %11, %cst_22 {dimension_numbers = #tpu.dot_dimension_numbers<[1], [0], [0], [1], [0, 0, 1, 1], [], []>} : vector<48x32xf32>, vector<32x48xf32>, vector<48x48xf32> -> vector<48x48xf32>
    %74 = arith.addf %73, %9 : vector<48x48xf32>
    %cst_23 = arith.constant dense<0xFF800000> : vector<48xf32>
    %75 = vector.multi_reduction <maximumf>, %74, %cst_23 [1] : vector<48x48xf32> to vector<48xf32>
    %76 = vector.shape_cast %75 : vector<48xf32> to vector<48x1xf32>
    %77 = vector.broadcast %76 : vector<48x1xf32> to vector<48x48xf32>
    %78 = arith.subf %74, %77 : vector<48x48xf32>
    %79 = math.exp %78 : vector<48x48xf32>
    %cst_24 = arith.constant dense<0.000000e+00> : vector<48xf32>
    %80 = vector.multi_reduction <add>, %79, %cst_24 [1] : vector<48x48xf32> to vector<48xf32>
    %81 = vector.shape_cast %80 : vector<48xf32> to vector<48x1xf32>
    %82 = tpu.reciprocal %81 {approx = true} : vector<48x1xf32> -> vector<48x1xf32>
    %83 = vector.broadcast %82 : vector<48x1xf32> to vector<48x48xf32>
    %84 = arith.mulf %79, %83 : vector<48x48xf32>
    %85 = vector.broadcast %70 : vector<1x32xf32> to vector<48x32xf32>
    %86 = arith.mulf %8, %85 : vector<48x32xf32>
    %cst_25 = arith.constant dense<0.000000e+00> : vector<48x32xf32>
    %87 = tpu.matmul %84, %86, %cst_25 {dimension_numbers = #tpu.dot_dimension_numbers<[1], [0], [0], [1], [0, 0, 1, 1], [], []>} : vector<48x48xf32>, vector<48x32xf32>, vector<48x32xf32> -> vector<48x32xf32>
    %88 = arith.addf %69, %87 : vector<48x32xf32>
    %89 = vector.extract_strided_slice %88 {offsets = [0, 0], sizes = [16, 32], strides = [1, 1]} : vector<48x32xf32> to vector<16x32xf32>
    %90 = vector.extract_strided_slice %88 {offsets = [16, 0], sizes = [16, 32], strides = [1, 1]} : vector<48x32xf32> to vector<16x32xf32>
    %91 = arith.addf %89, %90 : vector<16x32xf32>
    %92 = vector.extract_strided_slice %88 {offsets = [32, 0], sizes = [16, 32], strides = [1, 1]} : vector<48x32xf32> to vector<16x32xf32>
    %93 = arith.addf %91, %92 : vector<16x32xf32>
    %cst_26 = arith.constant 0.333333343 : f32
    %94 = vector.broadcast %cst_26 : f32 to vector<16x32xf32>
    %95 = arith.mulf %93, %94 : vector<16x32xf32>
    %c0_27 = arith.constant 0 : index
    %c0_28 = arith.constant 0 : index
    %96 = vector.load %arg4[%c0_27, %c0_28] : memref<32x32xf32, #tpu.memory_space<vmem>>, vector<32x32xf32>
    %cst_29 = arith.constant dense<0.000000e+00> : vector<16x32xf32>
    %97 = tpu.matmul %95, %96, %cst_29 {dimension_numbers = #tpu.dot_dimension_numbers<[1], [0], [0], [1], [0, 0, 1, 1], [], []>} : vector<16x32xf32>, vector<32x32xf32>, vector<16x32xf32> -> vector<16x32xf32>
    %c0_30 = arith.constant 0 : index
    %c0_31 = arith.constant 0 : index
    %98 = vector.load %arg5[%c0_30, %c0_31] : memref<1x32xf32, #tpu.memory_space<vmem>>, vector<1x32xf32>
    %99 = vector.broadcast %98 : vector<1x32xf32> to vector<16x32xf32>
    %100 = arith.addf %97, %99 : vector<16x32xf32>
    %c0_32 = arith.constant 0 : index
    %c0_33 = arith.constant 0 : index
    %101 = vector.load %arg8[%c0_32, %c0_33] : memref<16x32xf32, #tpu.memory_space<vmem>>, vector<16x32xf32>
    tpu.vector_store %arg8[%c0_32, %c0_33], %100 {strides = array<i32>} : memref<16x32xf32, #tpu.memory_space<vmem>>, vector<16x32xf32>,
    return
  }
  func.func @transform_0(%arg0: i32) -> (i32, i32) {
    %c0_i32 = arith.constant 0 : i32
    %c0_i32_0 = arith.constant 0 : i32
    return %arg0, %c0_i32 : i32, i32
  }
  func.func @transform_1(%arg0: i32) -> (i32, i32) {
    %c0_i32 = arith.constant 0 : i32
    %c0_i32_0 = arith.constant 0 : i32
    %c0_i32_1 = arith.constant 0 : i32
    return %c0_i32, %c0_i32_0 : i32, i32
  }
  func.func @transform_2(%arg0: i32) -> (i32, i32) {
    %c0_i32 = arith.constant 0 : i32
    %c0_i32_0 = arith.constant 0 : i32
    %c0_i32_1 = arith.constant 0 : i32
    return %c0_i32, %c0_i32_0 : i32, i32
  }
  func.func @transform_3(%arg0: i32) -> (i32, i32) {
    %c0_i32 = arith.constant 0 : i32
    %c0_i32_0 = arith.constant 0 : i32
    %c0_i32_1 = arith.constant 0 : i32
    return %c0_i32, %c0_i32_0 : i32, i32
  }
  func.func @transform_4(%arg0: i32) -> (i32, i32) {
    %c0_i32 = arith.constant 0 : i32
    %c0_i32_0 = arith.constant 0 : i32
    %c0_i32_1 = arith.constant 0 : i32
    return %c0_i32, %c0_i32_0 : i32, i32
  }
  func.func @transform_5(%arg0: i32) -> (i32, i32) {
    %c0_i32 = arith.constant 0 : i32
    %c0_i32_0 = arith.constant 0 : i32
    %c0_i32_1 = arith.constant 0 : i32
    return %c0_i32, %c0_i32_0 : i32, i32
  }
  func.func @transform_6(%arg0: i32) -> (i32, i32) {
    %c0_i32 = arith.constant 0 : i32
    %c0_i32_0 = arith.constant 0 : i32
    %c0_i32_1 = arith.constant 0 : i32
    return %c0_i32, %c0_i32_0 : i32, i32
  }
  func.func @transform_7(%arg0: i32) -> (i32, i32) {
    %c0_i32 = arith.constant 0 : i32
    %c0_i32_0 = arith.constant 0 : i32
    return %arg0, %c0_i32 : i32, i32
  }
}

</mosaic_0001>

<llo_original>
// kernel: tpu_custom_call.1
$region0: #{tpu_custom_call.1}
  #allocation0 [shape = 'u32[]', space=smem, size = 0x4, offset = 0x4, fixed_abs, tag = 'smem constant byte address 0x4 - core index']
  #allocation1 [shape = 'u32[144,128]{1,0:T(1,128)}', space=vmem, size = 0x12000, scoped, tag = 'internal scratch']
  %s0 = inlined_call_operand.vmem [shape: f32[48,32], index: 0, kind: input, shape index: {}]
  %s1 = inlined_call_operand.vmem [shape: f32[32,96], index: 1, kind: input, shape index: {}]
  %s2 = inlined_call_operand.vmem [shape: f32[1,96], index: 2, kind: input, shape index: {}]
  %s3 = inlined_call_operand.hbm [shape: f32[32,32], index: 3, kind: input, shape index: {}]
  %s4 = inlined_call_operand.vmem [shape: f32[1,32], index: 4, kind: input, shape index: {}]
  %s5 = inlined_call_operand.vmem [shape: f32[48,48], index: 5, kind: input, shape index: {}]
  %s6 = inlined_call_operand.vmem [shape: f32[4,32], index: 6, kind: input, shape index: {}]
  %s7 = inlined_call_operand.hbm [shape: f32[16,32], index: 7, kind: output, shape index: {}]
  %s8 = sld [smem:[#allocation0]]
  $region42: #{tpu_custom_call.1} parent=0
    _
  %s10 = ssub.s32 1, %s8
  %s11 = scalar_select 0, %s10, %s8
  $region1: #{tpu_custom_call.1} parent=0
    #allocation2 [shape = 'u8[16384]{0}', space=vmem, size = 0x4000, scoped, tag = 'input window, operand 3, single buffered']
    #allocation3 [shape = 's32[1]{0}', space=sflag, size = 0x4, scoped, tag = 'scoped memory for tpu_custom_call.1']
    #allocation4 [shape = 's32[1]{0}', space=sflag, size = 0x4, scoped, tag = 'scoped memory for tpu_custom_call.1']
    #allocation5 [shape = 'u8[8192]{0}', space=vmem, size = 0x2000, scoped, tag = 'output window, operand 0, single buffered']
    %12 = vsyncpa [#allocation3], 0
    %13 = vsyncpa [#allocation4], 0
    // Predicated region
    $region2: #{tpu_custom_call.1} parent=1 // pred_check
      _
    $region3: #{tpu_custom_call.1} parent=1 // pred_check_branch
      %15 = sbr.rel (0) target = $region5
    $region4: #{tpu_custom_call.1} parent=1 // pred_region
      _
    $region5: #{tpu_custom_call.1} parent=1 // pred_fallthru
      _
    // Predicated region
    $region6: #{tpu_custom_call.1} parent=1 // pred_check
      _
    $region7: #{tpu_custom_call.1} parent=1 // pred_check_branch
      %17 = sbr.rel (0) target = $region9
    $region8: #{tpu_custom_call.1} parent=1 // pred_region
      _
    $region9: #{tpu_custom_call.1} parent=1 // pred_fallthru
      _
    // Predicated region
    $region10: #{tpu_custom_call.1} parent=1 // pred_check
      _
    $region11: #{tpu_custom_call.1} parent=1 // pred_check_branch
      %19 = sbr.rel (0) target = $region13
    $region12: #{tpu_custom_call.1} parent=1 // pred_region
      _
    $region13: #{tpu_custom_call.1} parent=1 // pred_fallthru
      _
    // Predicated region
    $region14: #{tpu_custom_call.1} parent=1 // pred_check
      _
    $region15: #{tpu_custom_call.1} parent=1 // pred_check_branch
      %21 = sbr.rel (0) target = $region17
    $region16: #{tpu_custom_call.1} parent=1 // pred_region
      %s23 = ssub.s32 512, 512
      %24 = vsyncadd [#allocation3], %s23
      %s25 = sshll.u32 [#allocation2], 4
      %s26 = int_to_ptr.vmem [resolvable:$true] %s25
      %31 = dma.hbm_to_vmem [thread:$0]  %s3, 512, %s26, [#allocation3], 128, 128, 8
    $region17: #{tpu_custom_call.1} parent=1 // pred_fallthru
      _
    // Predicated region
    $region18: #{tpu_custom_call.1} parent=1 // pred_check
      _
    $region19: #{tpu_custom_call.1} parent=1 // pred_check_branch
      %33 = sbr.rel (0) target = $region21
    $region20: #{tpu_custom_call.1} parent=1 // pred_region
      _
    $region21: #{tpu_custom_call.1} parent=1 // pred_fallthru
      _
    // Predicated region
    $region22: #{tpu_custom_call.1} parent=1 // pred_check
      _
    $region23: #{tpu_custom_call.1} parent=1 // pred_check_branch
      %35 = sbr.rel (0) target = $region25
    $region24: #{tpu_custom_call.1} parent=1 // pred_region
      _
    $region25: #{tpu_custom_call.1} parent=1 // pred_fallthru
      _
    // Predicated region
    $region26: #{tpu_custom_call.1} parent=1 // pred_check
      _
    $region27: #{tpu_custom_call.1} parent=1 // pred_check_branch
      %37 = sbr.rel (0) target = $region29
    $region28: #{tpu_custom_call.1} parent=1 // pred_region
      _
    $region29: #{tpu_custom_call.1} parent=1 // pred_fallthru
      _
    // Predicated region
    $region30: #{tpu_custom_call.1} parent=1 // pred_check
      _
    $region31: #{tpu_custom_call.1} parent=1 // pred_check_branch
      %39 = sbr.rel (0) target = $region33
    $region32: #{tpu_custom_call.1} parent=1 // pred_region
      %40 = dma.done [#allocation3], 512
    $region33: #{tpu_custom_call.1} parent=1 // pred_fallthru
      _
    %v41 = vld [vmem:[%s0] sm:$0xff]
    %v42 = vld [vmem:[%s0 + $0x8] sm:$0xff]
    %v43 = vld [vmem:[%s0 + $0x10] sm:$0xff]
    %v44 = vld [vmem:[%s0 + $0x18] sm:$0xff]
    %v45 = vld [vmem:[%s0 + $0x20] sm:$0xff]
    %v46 = vld [vmem:[%s0 + $0x28] sm:$0xff]
    %v47 = vld [vmem:[%s1] sm:$0xff]
    %v48 = vld [vmem:[%s1 + $0x8] sm:$0xff]
    %v49 = vld [vmem:[%s1 + $0x10] sm:$0xff]
    %v50 = vld [vmem:[%s1 + $0x18] sm:$0xff]
    %v51 = vld [vmem:[%s2] sm:$0x1]
    %v53 = vlaneseq
    %v54 = vshrl.u32 %v53, 7
    %v55 = vsub.s32 0, %v54
    %v56 = vrot.slane %v51, %v55
    %vm58 = vcmask 261120
    %v60 = vsel %vm58, %v41, 0
    %v63 = vsel %vm58, %v42, 0
    %v66 = vsel %vm58, %v43, 0
    %v69 = vsel %vm58, %v44, 0
    %v72 = vsel %vm58, %v45, 0
    %v75 = vsel %vm58, %v46, 0
    %77 = vmatprep.subr.mxu0 0.0
    %78 = vmatpush1.msra.mxu0 0.0
    %79 = vmatprep.subr.mxu0 0.0
    %80 = vmatpush1.msra.mxu0 0.0
    %81 = vmatprep.subr.mxu0 0.0
    %82 = vmatpush1.msra.mxu0 0.0
    %83 = vmatprep.subr.mxu0 0.0
    %84 = vmatpush1.msra.mxu0 0.0
    %85 = vmatprep.subr.mxu0 0.0
    %86 = vmatpush1.msra.mxu0 0.0
    %87 = vmatprep.subr.mxu0 0.0
    %88 = vmatpush1.msra.mxu0 0.0
    %89 = vmatprep.subr.mxu0 0.0
    %90 = vmatpush1.msra.mxu0 0.0
    %91 = vmatprep.subr.mxu0 0.0
    %92 = vmatpush1.msra.mxu0 0.0
    %93 = vmatprep.subr.mxu0 0.0
    %94 = vmatpush1.msra.mxu0 0.0
    %95 = vmatprep.subr.mxu0 0.0
    %96 = vmatpush1.msra.mxu0 0.0
    %97 = vmatprep.subr.mxu0 0.0
    %98 = vmatpush1.msra.mxu0 0.0
    %99 = vmatprep.subr.mxu0 0.0
    %100 = vmatpush1.msra.mxu0 0.0
    %101 = vmatprep.subr.mxu0 0.0
    %102 = vmatpush1.msra.mxu0 %v50
    %103 = vmatprep.subr.mxu0 0.0
    %104 = vmatpush1.msra.mxu0 %v49
    %105 = vmatprep.subr.mxu0 0.0
    %106 = vmatpush1.msra.mxu0 %v48
    %107 = vmatprep.subr.mxu0 0.0
    %108 = vmatpush1.msra.mxu0 %v47
    %109 = vmatprep.subr.mxu0 0.0
    %110 = vmatpush2.msra.mxu0 0.0
    %111 = vmatprep.subr.mxu0 0.0
    %112 = vmatpush2.msra.mxu0 0.0
    %113 = vmatprep.subr.mxu0 0.0
    %114 = vmatpush2.msra.mxu0 0.0
    %115 = vmatprep.subr.mxu0 0.0
    %116 = vmatpush2.msra.mxu0 0.0
    %117 = vmatprep.subr.mxu0 0.0
    %118 = vmatpush2.msra.mxu0 0.0
    %119 = vmatprep.subr.mxu0 0.0
    %120 = vmatpush2.msra.mxu0 0.0
    %121 = vmatprep.subr.mxu0 0.0
    %122 = vmatpush2.msra.mxu0 0.0
    %123 = vmatprep.subr.mxu0 0.0
    %124 = vmatpush2.msra.mxu0 0.0
    %125 = vmatprep.subr.mxu0 0.0
    %126 = vmatpush2.msra.mxu0 0.0
    %127 = vmatprep.subr.mxu0 0.0
    %128 = vmatpush2.msra.mxu0 0.0
    %129 = vmatprep.subr.mxu0 0.0
    %130 = vmatpush2.msra.mxu0 0.0
    %131 = vmatprep.subr.mxu0 0.0
    %132 = vmatpush2.msra.mxu0 0.0
    %133 = vmatprep.subr.mxu0 0.0
    %134 = vmatpush2.msra.mxu0 0.0
    %135 = vmatprep.subr.mxu0 0.0
    %136 = vmatpush2.msra.mxu0 0.0
    %137 = vmatprep.subr.mxu0 0.0
    %138 = vmatpush2.msra.mxu0 0.0
    %139 = vmatprep.subr.mxu0 0.0
    %140 = vmatpush2.msra.mxu0 0.0
    %141 = vmatprep.mubr.f32.mxu0 0.0
    %142 = vmatmul.mubr.f32.gmra.mxu0 %v60
    %v143 = vpop.f32.mrf.mxu0
    %v144 = vadd.f32 %v56, %v143
    %v145 = vpop.f32.mrf.mxu0
    %146 = vmatprep.mubr.f32.mxu0 0.0
    %147 = vmatmul.mubr.f32.gmra.mxu0 %v63
    %v148 = vpop.f32.mrf.mxu0
    %v149 = vadd.f32 %v56, %v148
    %v150 = vpop.f32.mrf.mxu0
    %151 = vmatprep.mubr.f32.mxu0 0.0
    %152 = vmatmul.mubr.f32.gmra.mxu0 %v66
    %v153 = vpop.f32.mrf.mxu0
    %v154 = vadd.f32 %v56, %v153
    %v155 = vpop.f32.mrf.mxu0
    %156 = vmatprep.mubr.f32.mxu0 0.0
    %157 = vmatmul.mubr.f32.gmra.mxu0 %v69
    %v158 = vpop.f32.mrf.mxu0
    %v159 = vadd.f32 %v56, %v158
    %v160 = vpop.f32.mrf.mxu0
    %161 = vmatprep.mubr.f32.mxu0 0.0
    %162 = vmatmul.mubr.f32.gmra.mxu0 %v72
    %v163 = vpop.f32.mrf.mxu0
    %v164 = vadd.f32 %v56, %v163
    %v165 = vpop.f32.mrf.mxu0
    %166 = vmatprep.mubr.f32.mxu0 0.0
    %167 = vmatmul.mubr.f32.gmra.mxu0 %v75
    %v168 = vpop.f32.mrf.mxu0
    %v169 = vadd.f32 %v56, %v168
    %v170 = vpop.f32.mrf.mxu0
    %171 = vdwg.mxu0
    %v172 = vld [vmem:[%s5] sm:$0xff]
    %v173 = vld [vmem:[%s5 + $0x8] sm:$0xff]
    %v174 = vld [vmem:[%s5 + $0x10] sm:$0xff]
    %v175 = vld [vmem:[%s5 + $0x18] sm:$0xff]
    %v176 = vld [vmem:[%s5 + $0x20] sm:$0xff]
    %v177 = vld [vmem:[%s5 + $0x28] sm:$0xff]
    %v178 = vld [vmem:[%s6] sm:$0xf]
    %v179 = vlaneseq
    %v180 = vshrl.u32 %v179, 7
    %v181 = vsub.s32 0, %v180
    %v182 = vrot.slane %v178, %v181
    %v183 = vmul.f32 %v144, %v182
    %v184 = vmul.f32 %v149, %v182
    %v185 = vmul.f32 %v154, %v182
    %v186 = vmul.f32 %v159, %v182
    %v187 = vmul.f32 %v164, %v182
    %v188 = vmul.f32 %v169, %v182
    %195 = vrot.lane.b32.xlu0 %v144, 96
    %v196 = vpop.permute.xlu0 %195
    %197 = vrot.lane.b32.xlu0 %v149, 96
    %v198 = vpop.permute.xlu0 %197
    %199 = vrot.lane.b32.xlu0 %v154, 96
    %v200 = vpop.permute.xlu0 %199
    %201 = vrot.lane.b32.xlu0 %v159, 96
    %v202 = vpop.permute.xlu0 %201
    %203 = vrot.lane.b32.xlu0 %v164, 96
    %v204 = vpop.permute.xlu0 %203
    %205 = vrot.lane.b32.xlu0 %v169, 96
    %v206 = vpop.permute.xlu0 %205
    %v208 = vsel %vm58, %v183, 0
    %v211 = vsel %vm58, %v184, 0
    %v214 = vsel %vm58, %v185, 0
    %v217 = vsel %vm58, %v186, 0
    %v220 = vsel %vm58, %v187, 0
    %v223 = vsel %vm58, %v188, 0
    %v225 = vsel %vm58, %v196, 0
    %v227 = vsel %vm58, %v198, 0
    %v229 = vsel %vm58, %v200, 0
    %v231 = vsel %vm58, %v202, 0
    %v233 = vsel %vm58, %v204, 0
    %v235 = vsel %vm58, %v206, 0
    %237 = vmatprep.subr.mxu0 0.0
    %238 = vmatpush1.xpose.msra.mxu0 0.0
    %239 = vmatprep.subr.mxu0 0.0
    %240 = vmatpush1.xpose.msra.mxu0 0.0
    %241 = vmatprep.subr.mxu0 0.0
    %242 = vmatpush1.xpose.msra.mxu0 0.0
    %243 = vmatprep.subr.mxu0 0.0
    %244 = vmatpush1.xpose.msra.mxu0 0.0
    %245 = vmatprep.subr.mxu0 0.0
    %246 = vmatpush1.xpose.msra.mxu0 0.0
    %247 = vmatprep.subr.mxu0 0.0
    %248 = vmatpush1.xpose.msra.mxu0 0.0
    %249 = vmatprep.subr.mxu0 0.0
    %250 = vmatpush1.xpose.msra.mxu0 0.0
    %251 = vmatprep.subr.mxu0 0.0
    %252 = vmatpush1.xpose.msra.mxu0 0.0
    %253 = vmatprep.subr.mxu0 0.0
    %254 = vmatpush1.xpose.msra.mxu0 0.0
    %255 = vmatprep.subr.mxu0 0.0
    %256 = vmatpush1.xpose.msra.mxu0 0.0
    %257 = vmatprep.subr.mxu0 0.0
    %258 = vmatpush1.xpose.msra.mxu0 %v235
    %259 = vmatprep.subr.mxu0 0.0
    %260 = vmatpush1.xpose.msra.mxu0 %v233
    %261 = vmatprep.subr.mxu0 0.0
    %262 = vmatpush1.xpose.msra.mxu0 %v231
    %263 = vmatprep.subr.mxu0 0.0
    %264 = vmatpush1.xpose.msra.mxu0 %v229
    %265 = vmatprep.subr.mxu0 0.0
    %266 = vmatpush1.xpose.msra.mxu0 %v227
    %267 = vmatprep.subr.mxu0 0.0
    %268 = vmatpush1.xpose.msra.mxu0 %v225
    %269 = vmatprep.subr.mxu0 0.0
    %270 = vmatpush2.xpose.msra.mxu0 0.0
    %271 = vmatprep.subr.mxu0 0.0
    %272 = vmatpush2.xpose.msra.mxu0 0.0
    %273 = vmatprep.subr.mxu0 0.0
    %274 = vmatpush2.xpose.msra.mxu0 0.0
    %275 = vmatprep.subr.mxu0 0.0
    %276 = vmatpush2.xpose.msra.mxu0 0.0
    %277 = vmatprep.subr.mxu0 0.0
    %278 = vmatpush2.xpose.msra.mxu0 0.0
    %279 = vmatprep.subr.mxu0 0.0
    %280 = vmatpush2.xpose.msra.mxu0 0.0
    %281 = vmatprep.subr.mxu0 0.0
    %282 = vmatpush2.xpose.msra.mxu0 0.0
    %283 = vmatprep.subr.mxu0 0.0
    %284 = vmatpush2.xpose.msra.mxu0 0.0
    %285 = vmatprep.subr.mxu0 0.0
    %286 = vmatpush2.xpose.msra.mxu0 0.0
    %287 = vmatprep.subr.mxu0 0.0
    %288 = vmatpush2.xpose.msra.mxu0 0.0
    %289 = vmatprep.subr.mxu0 0.0
    %290 = vmatpush2.xpose.msra.mxu0 0.0
    %291 = vmatprep.subr.mxu0 0.0
    %292 = vmatpush2.xpose.msra.mxu0 0.0
    %293 = vmatprep.subr.mxu0 0.0
    %294 = vmatpush2.xpose.msra.mxu0 0.0
    %295 = vmatprep.subr.mxu0 0.0
    %296 = vmatpush2.xpose.msra.mxu0 0.0
    %297 = vmatprep.subr.mxu0 0.0
    %298 = vmatpush2.xpose.msra.mxu0 0.0
    %299 = vmatprep.subr.mxu0 0.0
    %300 = vmatpush2.xpose.msra.mxu0 0.0
    %301 = vmatprep.mubr.f32.mxu0 0.0
    %302 = vmatmul.mubr.f32.gmra.mxu0 %v208
    %v303 = vpop.f32.mrf.mxu0
    %v304 = vadd.f32 %v172, %v303
    %v305 = vpop.f32.mrf.mxu0
    %306 = vmatprep.mubr.f32.mxu0 0.0
    %307 = vmatmul.mubr.f32.gmra.mxu0 %v211
    %v308 = vpop.f32.mrf.mxu0
    %v309 = vadd.f32 %v173, %v308
    %v310 = vpop.f32.mrf.mxu0
    %311 = vmatprep.mubr.f32.mxu0 0.0
    %312 = vmatmul.mubr.f32.gmra.mxu0 %v214
    %v313 = vpop.f32.mrf.mxu0
    %v314 = vadd.f32 %v174, %v313
    %v315 = vpop.f32.mrf.mxu0
    %316 = vmatprep.mubr.f32.mxu0 0.0
    %317 = vmatmul.mubr.f32.gmra.mxu0 %v217
    %v318 = vpop.f32.mrf.mxu0
    %v319 = vadd.f32 %v175, %v318
    %v320 = vpop.f32.mrf.mxu0
    %321 = vmatprep.mubr.f32.mxu0 0.0
    %322 = vmatmul.mubr.f32.gmra.mxu0 %v220
    %v323 = vpop.f32.mrf.mxu0
    %v324 = vadd.f32 %v176, %v323
    %v325 = vpop.f32.mrf.mxu0
    %326 = vmatprep.mubr.f32.mxu0 0.0
    %327 = vmatmul.mubr.f32.gmra.mxu0 %v223
    %v328 = vpop.f32.mrf.mxu0
    %v329 = vadd.f32 %v177, %v328
    %v330 = vpop.f32.mrf.mxu0
    %331 = vdwg.mxu0
    %vm332 = vcmask 392192
    %v333 = vsel %vm332, %v304, -inf
    %334 = vmax.xlane.f32.xlu0 %v333
    %v335 = vpop.xlane.xlu0 %334
    %v336 = vsel %vm332, %v309, -inf
    %337 = vmax.xlane.f32.xlu0 %v336
    %v338 = vpop.xlane.xlu0 %337
    %v339 = vsel %vm332, %v314, -inf
    %340 = vmax.xlane.f32.xlu0 %v339
    %v341 = vpop.xlane.xlu0 %340
    %v342 = vsel %vm332, %v319, -inf
    %343 = vmax.xlane.f32.xlu0 %v342
    %v344 = vpop.xlane.xlu0 %343
    %v345 = vsel %vm332, %v324, -inf
    %346 = vmax.xlane.f32.xlu0 %v345
    %v347 = vpop.xlane.xlu0 %346
    %v348 = vsel %vm332, %v329, -inf
    %349 = vmax.xlane.f32.xlu0 %v348
    %v350 = vpop.xlane.xlu0 %349
    %v351 = vsub.f32 %v304, %v335
    %v352 = vsub.f32 %v309, %v338
    %v353 = vsub.f32 %v314, %v341
    %v354 = vsub.f32 %v319, %v344
    %v355 = vsub.f32 %v324, %v347
    %v356 = vsub.f32 %v329, %v350
    %v357 = vmul.f32 %v351, 1.442695
    %v358 = vpow.pop %v357
    %v359 = vmul.f32 %v352, 1.442695
    %v360 = vpow.pop %v359
    %v361 = vmul.f32 %v353, 1.442695
    %v362 = vpow.pop %v361
    %v363 = vmul.f32 %v354, 1.442695
    %v364 = vpow.pop %v363
    %v365 = vmul.f32 %v355, 1.442695
    %v366 = vpow.pop %v365
    %v367 = vmul.f32 %v356, 1.442695
    %v368 = vpow.pop %v367
    %v369 = vsel %vm332, %v358, 0.0
    %370 = vadd.xlane.f32.xlu0 %v369
    %v371 = vpop.xlane.xlu0 %370
    %v372 = vsel %vm332, %v360, 0.0
    %373 = vadd.xlane.f32.xlu0 %v372
    %v374 = vpop.xlane.xlu0 %373
    %v375 = vsel %vm332, %v362, 0.0
    %376 = vadd.xlane.f32.xlu0 %v375
    %v377 = vpop.xlane.xlu0 %376
    %v378 = vsel %vm332, %v364, 0.0
    %379 = vadd.xlane.f32.xlu0 %v378
    %v380 = vpop.xlane.xlu0 %379
    %v381 = vsel %vm332, %v366, 0.0
    %382 = vadd.xlane.f32.xlu0 %v381
    %v383 = vpop.xlane.xlu0 %382
    %v384 = vsel %vm332, %v368, 0.0
    %385 = vadd.xlane.f32.xlu0 %v384
    %v386 = vpop.xlane.xlu0 %385
    %v387 = vrcp.pop %v371
    %v388 = vrcp.pop %v374
    %v389 = vrcp.pop %v377
    %v390 = vrcp.pop %v380
    %v391 = vrcp.pop %v383
    %v392 = vrcp.pop %v386
    %v393 = vmul.f32 %v358, %v387
    %v394 = vmul.f32 %v360, %v388
    %v395 = vmul.f32 %v362, %v389
    %v396 = vmul.f32 %v364, %v390
    %v397 = vmul.f32 %v366, %v391
    %v398 = vmul.f32 %v368, %v392
    %400 = vrot.lane.b32.xlu0 %v182, 64
    %v401 = vpop.permute.xlu0 %400
    %v403 = vmul.f32 %v144, %v401
    %v404 = vmul.f32 %v149, %v401
    %v405 = vmul.f32 %v154, %v401
    %v406 = vmul.f32 %v159, %v401
    %v407 = vmul.f32 %v164, %v401
    %v408 = vmul.f32 %v169, %v401
    %v409 = vlaneseq
    %v410 = vshrl.u32 %v409, 7
    %v411 = vsub.s32 1, %v410
    %v412 = vrot.slane %v178, %v411
    %v413 = vmul.f32 %v144, %v412
    %v414 = vmul.f32 %v149, %v412
    %v415 = vmul.f32 %v154, %v412
    %v416 = vmul.f32 %v159, %v412
    %v417 = vmul.f32 %v164, %v412
    %v418 = vmul.f32 %v169, %v412
    %v420 = vsel %vm58, %v413, 0
    %v423 = vsel %vm58, %v414, 0
    %v426 = vsel %vm58, %v415, 0
    %v429 = vsel %vm58, %v416, 0
    %v432 = vsel %vm58, %v417, 0
    %v435 = vsel %vm58, %v418, 0
    %437 = vmatprep.subr.mxu0 0.0
    %438 = vmatpush1.xpose.msra.mxu0 0.0
    %439 = vmatprep.subr.mxu0 0.0
    %440 = vmatpush1.xpose.msra.mxu0 0.0
    %441 = vmatprep.subr.mxu0 0.0
    %442 = vmatpush1.xpose.msra.mxu0 0.0
    %443 = vmatprep.subr.mxu0 0.0
    %444 = vmatpush1.xpose.msra.mxu0 0.0
    %445 = vmatprep.subr.mxu0 0.0
    %446 = vmatpush1.xpose.msra.mxu0 0.0
    %447 = vmatprep.subr.mxu0 0.0
    %448 = vmatpush1.xpose.msra.mxu0 0.0
    %449 = vmatprep.subr.mxu0 0.0
    %450 = vmatpush1.xpose.msra.mxu0 0.0
    %451 = vmatprep.subr.mxu0 0.0
    %452 = vmatpush1.xpose.msra.mxu0 0.0
    %453 = vmatprep.subr.mxu0 0.0
    %454 = vmatpush1.xpose.msra.mxu0 0.0
    %455 = vmatprep.subr.mxu0 0.0
    %456 = vmatpush1.xpose.msra.mxu0 0.0
    %457 = vmatprep.subr.mxu0 0.0
    %458 = vmatpush1.xpose.msra.mxu0 %v235
    %459 = vmatprep.subr.mxu0 0.0
    %460 = vmatpush1.xpose.msra.mxu0 %v233
    %461 = vmatprep.subr.mxu0 0.0
    %462 = vmatpush1.xpose.msra.mxu0 %v231
    %463 = vmatprep.subr.mxu0 0.0
    %464 = vmatpush1.xpose.msra.mxu0 %v229
    %465 = vmatprep.subr.mxu0 0.0
    %466 = vmatpush1.xpose.msra.mxu0 %v227
    %467 = vmatprep.subr.mxu0 0.0
    %468 = vmatpush1.xpose.msra.mxu0 %v225
    %469 = vmatprep.subr.mxu0 0.0
    %470 = vmatpush2.xpose.msra.mxu0 0.0
    %471 = vmatprep.subr.mxu0 0.0
    %472 = vmatpush2.xpose.msra.mxu0 0.0
    %473 = vmatprep.subr.mxu0 0.0
    %474 = vmatpush2.xpose.msra.mxu0 0.0
    %475 = vmatprep.subr.mxu0 0.0
    %476 = vmatpush2.xpose.msra.mxu0 0.0
    %477 = vmatprep.subr.mxu0 0.0
    %478 = vmatpush2.xpose.msra.mxu0 0.0
    %479 = vmatprep.subr.mxu0 0.0
    %480 = vmatpush2.xpose.msra.mxu0 0.0
    %481 = vmatprep.subr.mxu0 0.0
    %482 = vmatpush2.xpose.msra.mxu0 0.0
    %483 = vmatprep.subr.mxu0 0.0
    %484 = vmatpush2.xpose.msra.mxu0 0.0
    %485 = vmatprep.subr.mxu0 0.0
    %486 = vmatpush2.xpose.msra.mxu0 0.0
    %487 = vmatprep.subr.mxu0 0.0
    %488 = vmatpush2.xpose.msra.mxu0 0.0
    %489 = vmatprep.subr.mxu0 0.0
    %490 = vmatpush2.xpose.msra.mxu0 0.0
    %491 = vmatprep.subr.mxu0 0.0
    %492 = vmatpush2.xpose.msra.mxu0 0.0
    %493 = vmatprep.subr.mxu0 0.0
    %494 = vmatpush2.xpose.msra.mxu0 0.0
    %495 = vmatprep.subr.mxu0 0.0
    %496 = vmatpush2.xpose.msra.mxu0 0.0
    %497 = vmatprep.subr.mxu0 0.0
    %498 = vmatpush2.xpose.msra.mxu0 0.0
    %499 = vmatprep.subr.mxu0 0.0
    %500 = vmatpush2.xpose.msra.mxu0 0.0
    %501 = vmatprep.mubr.f32.mxu0 0.0
    %502 = vmatmul.mubr.f32.gmra.mxu0 %v420
    %v503 = vpop.f32.mrf.mxu0
    %v504 = vadd.f32 %v172, %v503
    %v505 = vpop.f32.mrf.mxu0
    %506 = vmatprep.mubr.f32.mxu0 0.0
    %507 = vmatmul.mubr.f32.gmra.mxu0 %v423
    %v508 = vpop.f32.mrf.mxu0
    %v509 = vadd.f32 %v173, %v508
    %v510 = vpop.f32.mrf.mxu0
    %511 = vmatprep.mubr.f32.mxu0 0.0
    %512 = vmatmul.mubr.f32.gmra.mxu0 %v426
    %v513 = vpop.f32.mrf.mxu0
    %v514 = vadd.f32 %v174, %v513
    %v515 = vpop.f32.mrf.mxu0
    %516 = vmatprep.mubr.f32.mxu0 0.0
    %517 = vmatmul.mubr.f32.gmra.mxu0 %v429
    %v518 = vpop.f32.mrf.mxu0
    %v519 = vadd.f32 %v175, %v518
    %v520 = vpop.f32.mrf.mxu0
    %521 = vmatprep.mubr.f32.mxu0 0.0
    %522 = vmatmul.mubr.f32.gmra.mxu0 %v432
    %v523 = vpop.f32.mrf.mxu0
    %v524 = vadd.f32 %v176, %v523
    %v525 = vpop.f32.mrf.mxu0
    %526 = vmatprep.mubr.f32.mxu0 0.0
    %527 = vmatmul.mubr.f32.gmra.mxu0 %v435
    %v528 = vpop.f32.mrf.mxu0
    %v529 = vadd.f32 %v177, %v528
    %v530 = vpop.f32.mrf.mxu0
    %531 = vdwg.mxu0
    %v532 = vsel %vm332, %v504, -inf
    %533 = vmax.xlane.f32.xlu0 %v532
    %v534 = vpop.xlane.xlu0 %533
    %v535 = vsel %vm332, %v509, -inf
    %536 = vmax.xlane.f32.xlu0 %v535
    %v537 = vpop.xlane.xlu0 %536
    %v538 = vsel %vm332, %v514, -inf
    %539 = vmax.xlane.f32.xlu0 %v538
    %v540 = vpop.xlane.xlu0 %539
    %v541 = vsel %vm332, %v519, -inf
    %542 = vmax.xlane.f32.xlu0 %v541
    %v543 = vpop.xlane.xlu0 %542
    %v544 = vsel %vm332, %v524, -inf
    %545 = vmax.xlane.f32.xlu0 %v544
    %v546 = vpop.xlane.xlu0 %545
    %v547 = vsel %vm332, %v529, -inf
    %548 = vmax.xlane.f32.xlu0 %v547
    %v549 = vpop.xlane.xlu0 %548
    %v550 = vsub.f32 %v504, %v534
    %v551 = vsub.f32 %v509, %v537
    %v552 = vsub.f32 %v514, %v540
    %v553 = vsub.f32 %v519, %v543
    %v554 = vsub.f32 %v524, %v546
    %v555 = vsub.f32 %v529, %v549
    %v556 = vmul.f32 %v550, 1.442695
    %v557 = vpow.pop %v556
    %v558 = vmul.f32 %v551, 1.442695
    %v559 = vpow.pop %v558
    %v560 = vmul.f32 %v552, 1.442695
    %v561 = vpow.pop %v560
    %v562 = vmul.f32 %v553, 1.442695
    %v563 = vpow.pop %v562
    %v564 = vmul.f32 %v554, 1.442695
    %v565 = vpow.pop %v564
    %v566 = vmul.f32 %v555, 1.442695
    %v567 = vpow.pop %v566
    %v568 = vsel %vm332, %v557, 0.0
    %569 = vadd.xlane.f32.xlu0 %v568
    %v570 = vpop.xlane.xlu0 %569
    %v571 = vsel %vm332, %v559, 0.0
    %572 = vadd.xlane.f32.xlu0 %v571
    %v573 = vpop.xlane.xlu0 %572
    %v574 = vsel %vm332, %v561, 0.0
    %575 = vadd.xlane.f32.xlu0 %v574
    %v576 = vpop.xlane.xlu0 %575
    %v577 = vsel %vm332, %v563, 0.0
    %578 = vadd.xlane.f32.xlu0 %v577
    %v579 = vpop.xlane.xlu0 %578
    %v580 = vsel %vm332, %v565, 0.0
    %581 = vadd.xlane.f32.xlu0 %v580
    %v582 = vpop.xlane.xlu0 %581
    %v583 = vsel %vm332, %v567, 0.0
    %584 = vadd.xlane.f32.xlu0 %v583
    %v585 = vpop.xlane.xlu0 %584
    %v586 = vrcp.pop %v570
    %v587 = vrcp.pop %v573
    %v588 = vrcp.pop %v576
    %v589 = vrcp.pop %v579
    %v590 = vrcp.pop %v582
    %v591 = vrcp.pop %v585
    %v592 = vmul.f32 %v557, %v586
    %v593 = vmul.f32 %v559, %v587
    %v594 = vmul.f32 %v561, %v588
    %v595 = vmul.f32 %v563, %v589
    %v596 = vmul.f32 %v565, %v590
    %v597 = vmul.f32 %v567, %v591
    %599 = vrot.lane.b32.xlu0 %v412, 64
    %v600 = vpop.permute.xlu0 %599
    %v602 = vmul.f32 %v144, %v600
    %v603 = vmul.f32 %v149, %v600
    %v604 = vmul.f32 %v154, %v600
    %v605 = vmul.f32 %v159, %v600
    %v606 = vmul.f32 %v164, %v600
    %v607 = vmul.f32 %v169, %v600
    %614 = vrot.lane.b32.xlu0 %v602, 64
    %v615 = vpop.permute.xlu0 %614
    %616 = vrot.lane.b32.xlu0 %v603, 64
    %v617 = vpop.permute.xlu0 %616
    %618 = vrot.lane.b32.xlu0 %v604, 64
    %v619 = vpop.permute.xlu0 %618
    %620 = vrot.lane.b32.xlu0 %v605, 64
    %v621 = vpop.permute.xlu0 %620
    %622 = vrot.lane.b32.xlu0 %v606, 64
    %v623 = vpop.permute.xlu0 %622
    %624 = vrot.lane.b32.xlu0 %v607, 64
    %v625 = vpop.permute.xlu0 %624
    %v633 = vsel %vm332, %v592, 0
    %v636 = vsel %vm332, %v593, 0
    %v639 = vsel %vm332, %v594, 0
    %v642 = vsel %vm332, %v595, 0
    %v645 = vsel %vm332, %v596, 0
    %v648 = vsel %vm332, %v597, 0
    %650 = vmatprep.subr.mxu0 0.0
    %651 = vmatpush1.msra.mxu0 0.0
    %652 = vmatprep.subr.mxu0 0.0
    %653 = vmatpush1.msra.mxu0 0.0
    %654 = vmatprep.subr.mxu0 0.0
    %655 = vmatpush1.msra.mxu0 0.0
    %656 = vmatprep.subr.mxu0 0.0
    %657 = vmatpush1.msra.mxu0 0.0
    %658 = vmatprep.subr.mxu0 0.0
    %659 = vmatpush1.msra.mxu0 0.0
    %660 = vmatprep.subr.mxu0 0.0
    %661 = vmatpush1.msra.mxu0 0.0
    %662 = vmatprep.subr.mxu0 0.0
    %663 = vmatpush1.msra.mxu0 0.0
    %664 = vmatprep.subr.mxu0 0.0
    %665 = vmatpush1.msra.mxu0 0.0
    %666 = vmatprep.subr.mxu0 0.0
    %667 = vmatpush1.msra.mxu0 0.0
    %668 = vmatprep.subr.mxu0 0.0
    %669 = vmatpush1.msra.mxu0 0.0
    %670 = vmatprep.subr.mxu0 0.0
    %671 = vmatpush1.msra.mxu0 %v625
    %672 = vmatprep.subr.mxu0 0.0
    %673 = vmatpush1.msra.mxu0 %v623
    %674 = vmatprep.subr.mxu0 0.0
    %675 = vmatpush1.msra.mxu0 %v621
    %676 = vmatprep.subr.mxu0 0.0
    %677 = vmatpush1.msra.mxu0 %v619
    %678 = vmatprep.subr.mxu0 0.0
    %679 = vmatpush1.msra.mxu0 %v617
    %680 = vmatprep.subr.mxu0 0.0
    %681 = vmatpush1.msra.mxu0 %v615
    %682 = vmatprep.subr.mxu0 0.0
    %683 = vmatpush2.msra.mxu0 0.0
    %684 = vmatprep.subr.mxu0 0.0
    %685 = vmatpush2.msra.mxu0 0.0
    %686 = vmatprep.subr.mxu0 0.0
    %687 = vmatpush2.msra.mxu0 0.0
    %688 = vmatprep.subr.mxu0 0.0
    %689 = vmatpush2.msra.mxu0 0.0
    %690 = vmatprep.subr.mxu0 0.0
    %691 = vmatpush2.msra.mxu0 0.0
    %692 = vmatprep.subr.mxu0 0.0
    %693 = vmatpush2.msra.mxu0 0.0
    %694 = vmatprep.subr.mxu0 0.0
    %695 = vmatpush2.msra.mxu0 0.0
    %696 = vmatprep.subr.mxu0 0.0
    %697 = vmatpush2.msra.mxu0 0.0
    %698 = vmatprep.subr.mxu0 0.0
    %699 = vmatpush2.msra.mxu0 0.0
    %700 = vmatprep.subr.mxu0 0.0
    %701 = vmatpush2.msra.mxu0 0.0
    %702 = vmatprep.subr.mxu0 0.0
    %703 = vmatpush2.msra.mxu0 0.0
    %704 = vmatprep.subr.mxu0 0.0
    %705 = vmatpush2.msra.mxu0 0.0
    %706 = vmatprep.subr.mxu0 0.0
    %707 = vmatpush2.msra.mxu0 0.0
    %708 = vmatprep.subr.mxu0 0.0
    %709 = vmatpush2.msra.mxu0 0.0
    %710 = vmatprep.subr.mxu0 0.0
    %711 = vmatpush2.msra.mxu0 0.0
    %712 = vmatprep.subr.mxu0 0.0
    %713 = vmatpush2.msra.mxu0 0.0
    %714 = vmatprep.mubr.f32.mxu0 0.0
    %715 = vmatmul.mubr.f32.gmra.mxu0 %v633
    %v716 = vpop.f32.mrf.mxu0
    %v717 = vadd.f32 0.0, %v716
    %v718 = vpop.f32.mrf.mxu0
    %719 = vmatprep.mubr.f32.mxu0 0.0
    %720 = vmatmul.mubr.f32.gmra.mxu0 %v636
    %v721 = vpop.f32.mrf.mxu0
    %v722 = vadd.f32 0.0, %v721
    %v723 = vpop.f32.mrf.mxu0
    %724 = vmatprep.mubr.f32.mxu0 0.0
    %725 = vmatmul.mubr.f32.gmra.mxu0 %v639
    %v726 = vpop.f32.mrf.mxu0
    %v727 = vadd.f32 0.0, %v726
    %v728 = vpop.f32.mrf.mxu0
    %729 = vmatprep.mubr.f32.mxu0 0.0
    %730 = vmatmul.mubr.f32.gmra.mxu0 %v642
    %v731 = vpop.f32.mrf.mxu0
    %v732 = vadd.f32 0.0, %v731
    %v733 = vpop.f32.mrf.mxu0
    %734 = vmatprep.mubr.f32.mxu0 0.0
    %735 = vmatmul.mubr.f32.gmra.mxu0 %v645
    %v736 = vpop.f32.mrf.mxu0
    %v737 = vadd.f32 0.0, %v736
    %v738 = vpop.f32.mrf.mxu0
    %739 = vmatprep.mubr.f32.mxu0 0.0
    %740 = vmatmul.mubr.f32.gmra.mxu0 %v648
    %v741 = vpop.f32.mrf.mxu0
    %v742 = vadd.f32 0.0, %v741
    %v743 = vpop.f32.mrf.mxu0
    %744 = vdwg.mxu0
    %751 = vrot.lane.b32.xlu0 %v403, 64
    %v752 = vpop.permute.xlu0 %751
    %753 = vrot.lane.b32.xlu0 %v404, 64
    %v754 = vpop.permute.xlu0 %753
    %755 = vrot.lane.b32.xlu0 %v405, 64
    %v756 = vpop.permute.xlu0 %755
    %757 = vrot.lane.b32.xlu0 %v406, 64
    %v758 = vpop.permute.xlu0 %757
    %759 = vrot.lane.b32.xlu0 %v407, 64
    %v760 = vpop.permute.xlu0 %759
    %761 = vrot.lane.b32.xlu0 %v408, 64
    %v762 = vpop.permute.xlu0 %761
    %v770 = vsel %vm332, %v393, 0
    %v773 = vsel %vm332, %v394, 0
    %v776 = vsel %vm332, %v395, 0
    %v779 = vsel %vm332, %v396, 0
    %v782 = vsel %vm332, %v397, 0
    %v785 = vsel %vm332, %v398, 0
    %787 = vmatprep.subr.mxu0 0.0
    %788 = vmatpush1.msra.mxu0 0.0
    %789 = vmatprep.subr.mxu0 0.0
    %790 = vmatpush1.msra.mxu0 0.0
    %791 = vmatprep.subr.mxu0 0.0
    %792 = vmatpush1.msra.mxu0 0.0
    %793 = vmatprep.subr.mxu0 0.0
    %794 = vmatpush1.msra.mxu0 0.0
    %795 = vmatprep.subr.mxu0 0.0
    %796 = vmatpush1.msra.mxu0 0.0
    %797 = vmatprep.subr.mxu0 0.0
    %798 = vmatpush1.msra.mxu0 0.0
    %799 = vmatprep.subr.mxu0 0.0
    %800 = vmatpush1.msra.mxu0 0.0
    %801 = vmatprep.subr.mxu0 0.0
    %802 = vmatpush1.msra.mxu0 0.0
    %803 = vmatprep.subr.mxu0 0.0
    %804 = vmatpush1.msra.mxu0 0.0
    %805 = vmatprep.subr.mxu0 0.0
    %806 = vmatpush1.msra.mxu0 0.0
    %807 = vmatprep.subr.mxu0 0.0
    %808 = vmatpush1.msra.mxu0 %v762
    %809 = vmatprep.subr.mxu0 0.0
    %810 = vmatpush1.msra.mxu0 %v760
    %811 = vmatprep.subr.mxu0 0.0
    %812 = vmatpush1.msra.mxu0 %v758
    %813 = vmatprep.subr.mxu0 0.0
    %814 = vmatpush1.msra.mxu0 %v756
    %815 = vmatprep.subr.mxu0 0.0
    %816 = vmatpush1.msra.mxu0 %v754
    %817 = vmatprep.subr.mxu0 0.0
    %818 = vmatpush1.msra.mxu0 %v752
    %819 = vmatprep.subr.mxu0 0.0
    %820 = vmatpush2.msra.mxu0 0.0
    %821 = vmatprep.subr.mxu0 0.0
    %822 = vmatpush2.msra.mxu0 0.0
    %823 = vmatprep.subr.mxu0 0.0
    %824 = vmatpush2.msra.mxu0 0.0
    %825 = vmatprep.subr.mxu0 0.0
    %826 = vmatpush2.msra.mxu0 0.0
    %827 = vmatprep.subr.mxu0 0.0
    %828 = vmatpush2.msra.mxu0 0.0
    %829 = vmatprep.subr.mxu0 0.0
    %830 = vmatpush2.msra.mxu0 0.0
    %831 = vmatprep.subr.mxu0 0.0
    %832 = vmatpush2.msra.mxu0 0.0
    %833 = vmatprep.subr.mxu0 0.0
    %834 = vmatpush2.msra.mxu0 0.0
    %835 = vmatprep.subr.mxu0 0.0
    %836 = vmatpush2.msra.mxu0 0.0
    %837 = vmatprep.subr.mxu0 0.0
    %838 = vmatpush2.msra.mxu0 0.0
    %839 = vmatprep.subr.mxu0 0.0
    %840 = vmatpush2.msra.mxu0 0.0
    %841 = vmatprep.subr.mxu0 0.0
    %842 = vmatpush2.msra.mxu0 0.0
    %843 = vmatprep.subr.mxu0 0.0
    %844 = vmatpush2.msra.mxu0 0.0
    %845 = vmatprep.subr.mxu0 0.0
    %846 = vmatpush2.msra.mxu0 0.0
    %847 = vmatprep.subr.mxu0 0.0
    %848 = vmatpush2.msra.mxu0 0.0
    %849 = vmatprep.subr.mxu0 0.0
    %850 = vmatpush2.msra.mxu0 0.0
    %851 = vmatprep.mubr.f32.mxu0 0.0
    %852 = vmatmul.mubr.f32.gmra.mxu0 %v770
    %v853 = vpop.f32.mrf.mxu0
    %v854 = vadd.f32 %v717, %v853
    %v855 = vpop.f32.mrf.mxu0
    %856 = vmatprep.mubr.f32.mxu0 0.0
    %857 = vmatmul.mubr.f32.gmra.mxu0 %v773
    %v858 = vpop.f32.mrf.mxu0
    %v859 = vadd.f32 %v722, %v858
    %v860 = vpop.f32.mrf.mxu0
    %861 = vmatprep.mubr.f32.mxu0 0.0
    %862 = vmatmul.mubr.f32.gmra.mxu0 %v776
    %v863 = vpop.f32.mrf.mxu0
    %v864 = vadd.f32 %v727, %v863
    %v865 = vpop.f32.mrf.mxu0
    %866 = vmatprep.mubr.f32.mxu0 0.0
    %867 = vmatmul.mubr.f32.gmra.mxu0 %v779
    %v868 = vpop.f32.mrf.mxu0
    %v869 = vadd.f32 %v732, %v868
    %v870 = vpop.f32.mrf.mxu0
    %871 = vmatprep.mubr.f32.mxu0 0.0
    %872 = vmatmul.mubr.f32.gmra.mxu0 %v782
    %v873 = vpop.f32.mrf.mxu0
    %v874 = vadd.f32 %v737, %v873
    %v875 = vpop.f32.mrf.mxu0
    %876 = vmatprep.mubr.f32.mxu0 0.0
    %877 = vmatmul.mubr.f32.gmra.mxu0 %v785
    %v878 = vpop.f32.mrf.mxu0
    %v879 = vadd.f32 %v742, %v878
    %v880 = vpop.f32.mrf.mxu0
    %881 = vdwg.mxu0
    %v882 = vlaneseq
    %v883 = vshrl.u32 %v882, 7
    %v884 = vsub.s32 2, %v883
    %v885 = vrot.slane %v178, %v884
    %v886 = vmul.f32 %v144, %v885
    %v887 = vmul.f32 %v149, %v885
    %v888 = vmul.f32 %v154, %v885
    %v889 = vmul.f32 %v159, %v885
    %v890 = vmul.f32 %v164, %v885
    %v891 = vmul.f32 %v169, %v885
    %v893 = vsel %vm58, %v886, 0
    %v896 = vsel %vm58, %v887, 0
    %v899 = vsel %vm58, %v888, 0
    %v902 = vsel %vm58, %v889, 0
    %v905 = vsel %vm58, %v890, 0
    %v908 = vsel %vm58, %v891, 0
    %910 = vmatprep.subr.mxu0 0.0
    %911 = vmatpush1.xpose.msra.mxu0 0.0
    %912 = vmatprep.subr.mxu0 0.0
    %913 = vmatpush1.xpose.msra.mxu0 0.0
    %914 = vmatprep.subr.mxu0 0.0
    %915 = vmatpush1.xpose.msra.mxu0 0.0
    %916 = vmatprep.subr.mxu0 0.0
    %917 = vmatpush1.xpose.msra.mxu0 0.0
    %918 = vmatprep.subr.mxu0 0.0
    %919 = vmatpush1.xpose.msra.mxu0 0.0
    %920 = vmatprep.subr.mxu0 0.0
    %921 = vmatpush1.xpose.msra.mxu0 0.0
    %922 = vmatprep.subr.mxu0 0.0
    %923 = vmatpush1.xpose.msra.mxu0 0.0
    %924 = vmatprep.subr.mxu0 0.0
    %925 = vmatpush1.xpose.msra.mxu0 0.0
    %926 = vmatprep.subr.mxu0 0.0
    %927 = vmatpush1.xpose.msra.mxu0 0.0
    %928 = vmatprep.subr.mxu0 0.0
    %929 = vmatpush1.xpose.msra.mxu0 0.0
    %930 = vmatprep.subr.mxu0 0.0
    %931 = vmatpush1.xpose.msra.mxu0 %v235
    %932 = vmatprep.subr.mxu0 0.0
    %933 = vmatpush1.xpose.msra.mxu0 %v233
    %934 = vmatprep.subr.mxu0 0.0
    %935 = vmatpush1.xpose.msra.mxu0 %v231
    %936 = vmatprep.subr.mxu0 0.0
    %937 = vmatpush1.xpose.msra.mxu0 %v229
    %938 = vmatprep.subr.mxu0 0.0
    %939 = vmatpush1.xpose.msra.mxu0 %v227
    %940 = vmatprep.subr.mxu0 0.0
    %941 = vmatpush1.xpose.msra.mxu0 %v225
    %942 = vmatprep.subr.mxu0 0.0
    %943 = vmatpush2.xpose.msra.mxu0 0.0
    %944 = vmatprep.subr.mxu0 0.0
    %945 = vmatpush2.xpose.msra.mxu0 0.0
    %946 = vmatprep.subr.mxu0 0.0
    %947 = vmatpush2.xpose.msra.mxu0 0.0
    %948 = vmatprep.subr.mxu0 0.0
    %949 = vmatpush2.xpose.msra.mxu0 0.0
    %950 = vmatprep.subr.mxu0 0.0
    %951 = vmatpush2.xpose.msra.mxu0 0.0
    %952 = vmatprep.subr.mxu0 0.0
    %953 = vmatpush2.xpose.msra.mxu0 0.0
    %954 = vmatprep.subr.mxu0 0.0
    %955 = vmatpush2.xpose.msra.mxu0 0.0
    %956 = vmatprep.subr.mxu0 0.0
    %957 = vmatpush2.xpose.msra.mxu0 0.0
    %958 = vmatprep.subr.mxu0 0.0
    %959 = vmatpush2.xpose.msra.mxu0 0.0
    %960 = vmatprep.subr.mxu0 0.0
    %961 = vmatpush2.xpose.msra.mxu0 0.0
    %962 = vmatprep.subr.mxu0 0.0
    %963 = vmatpush2.xpose.msra.mxu0 0.0
    %964 = vmatprep.subr.mxu0 0.0
    %965 = vmatpush2.xpose.msra.mxu0 0.0
    %966 = vmatprep.subr.mxu0 0.0
    %967 = vmatpush2.xpose.msra.mxu0 0.0
    %968 = vmatprep.subr.mxu0 0.0
    %969 = vmatpush2.xpose.msra.mxu0 0.0
    %970 = vmatprep.subr.mxu0 0.0
    %971 = vmatpush2.xpose.msra.mxu0 0.0
    %972 = vmatprep.subr.mxu0 0.0
    %973 = vmatpush2.xpose.msra.mxu0 0.0
    %974 = vmatprep.mubr.f32.mxu0 0.0
    %975 = vmatmul.mubr.f32.gmra.mxu0 %v893
    %v976 = vpop.f32.mrf.mxu0
    %v977 = vadd.f32 %v172, %v976
    %v978 = vpop.f32.mrf.mxu0
    %979 = vmatprep.mubr.f32.mxu0 0.0
    %980 = vmatmul.mubr.f32.gmra.mxu0 %v896
    %v981 = vpop.f32.mrf.mxu0
    %v982 = vadd.f32 %v173, %v981
    %v983 = vpop.f32.mrf.mxu0
    %984 = vmatprep.mubr.f32.mxu0 0.0
    %985 = vmatmul.mubr.f32.gmra.mxu0 %v899
    %v986 = vpop.f32.mrf.mxu0
    %v987 = vadd.f32 %v174, %v986
    %v988 = vpop.f32.mrf.mxu0
    %989 = vmatprep.mubr.f32.mxu0 0.0
    %990 = vmatmul.mubr.f32.gmra.mxu0 %v902
    %v991 = vpop.f32.mrf.mxu0
    %v992 = vadd.f32 %v175, %v991
    %v993 = vpop.f32.mrf.mxu0
    %994 = vmatprep.mubr.f32.mxu0 0.0
    %995 = vmatmul.mubr.f32.gmra.mxu0 %v905
    %v996 = vpop.f32.mrf.mxu0
    %v997 = vadd.f32 %v176, %v996
    %v998 = vpop.f32.mrf.mxu0
    %999 = vmatprep.mubr.f32.mxu0 0.0
    %1000 = vmatmul.mubr.f32.gmra.mxu0 %v908
    %v1001 = vpop.f32.mrf.mxu0
    %v1002 = vadd.f32 %v177, %v1001
    %v1003 = vpop.f32.mrf.mxu0
    %1004 = vdwg.mxu0
    %v1005 = vsel %vm332, %v977, -inf
    %1006 = vmax.xlane.f32.xlu0 %v1005
    %v1007 = vpop.xlane.xlu0 %1006
    %v1008 = vsel %vm332, %v982, -inf
    %1009 = vmax.xlane.f32.xlu0 %v1008
    %v1010 = vpop.xlane.xlu0 %1009
    %v1011 = vsel %vm332, %v987, -inf
    %1012 = vmax.xlane.f32.xlu0 %v1011
    %v1013 = vpop.xlane.xlu0 %1012
    %v1014 = vsel %vm332, %v992, -inf
    %1015 = vmax.xlane.f32.xlu0 %v1014
    %v1016 = vpop.xlane.xlu0 %1015
    %v1017 = vsel %vm332, %v997, -inf
    %1018 = vmax.xlane.f32.xlu0 %v1017
    %v1019 = vpop.xlane.xlu0 %1018
    %v1020 = vsel %vm332, %v1002, -inf
    %1021 = vmax.xlane.f32.xlu0 %v1020
    %v1022 = vpop.xlane.xlu0 %1021
    %v1023 = vsub.f32 %v977, %v1007
    %v1024 = vsub.f32 %v982, %v1010
    %v1025 = vsub.f32 %v987, %v1013
    %v1026 = vsub.f32 %v992, %v1016
    %v1027 = vsub.f32 %v997, %v1019
    %v1028 = vsub.f32 %v1002, %v1022
    %v1029 = vmul.f32 %v1023, 1.442695
    %v1030 = vpow.pop %v1029
    %v1031 = vmul.f32 %v1024, 1.442695
    %v1032 = vpow.pop %v1031
    %v1033 = vmul.f32 %v1025, 1.442695
    %v1034 = vpow.pop %v1033
    %v1035 = vmul.f32 %v1026, 1.442695
    %v1036 = vpow.pop %v1035
    %v1037 = vmul.f32 %v1027, 1.442695
    %v1038 = vpow.pop %v1037
    %v1039 = vmul.f32 %v1028, 1.442695
    %v1040 = vpow.pop %v1039
    %v1041 = vsel %vm332, %v1030, 0.0
    %1042 = vadd.xlane.f32.xlu0 %v1041
    %v1043 = vpop.xlane.xlu0 %1042
    %v1044 = vsel %vm332, %v1032, 0.0
    %1045 = vadd.xlane.f32.xlu0 %v1044
    %v1046 = vpop.xlane.xlu0 %1045
    %v1047 = vsel %vm332, %v1034, 0.0
    %1048 = vadd.xlane.f32.xlu0 %v1047
    %v1049 = vpop.xlane.xlu0 %1048
    %v1050 = vsel %vm332, %v1036, 0.0
    %1051 = vadd.xlane.f32.xlu0 %v1050
    %v1052 = vpop.xlane.xlu0 %1051
    %v1053 = vsel %vm332, %v1038, 0.0
    %1054 = vadd.xlane.f32.xlu0 %v1053
    %v1055 = vpop.xlane.xlu0 %1054
    %v1056 = vsel %vm332, %v1040, 0.0
    %1057 = vadd.xlane.f32.xlu0 %v1056
    %v1058 = vpop.xlane.xlu0 %1057
    %v1059 = vrcp.pop %v1043
    %v1060 = vrcp.pop %v1046
    %v1061 = vrcp.pop %v1049
    %v1062 = vrcp.pop %v1052
    %v1063 = vrcp.pop %v1055
    %v1064 = vrcp.pop %v1058
    %v1065 = vmul.f32 %v1030, %v1059
    %v1066 = vmul.f32 %v1032, %v1060
    %v1067 = vmul.f32 %v1034, %v1061
    %v1068 = vmul.f32 %v1036, %v1062
    %v1069 = vmul.f32 %v1038, %v1063
    %v1070 = vmul.f32 %v1040, %v1064
    %1072 = vrot.lane.b32.xlu0 %v885, 64
    %v1073 = vpop.permute.xlu0 %1072
    %v1075 = vmul.f32 %v144, %v1073
    %v1076 = vmul.f32 %v149, %v1073
    %v1077 = vmul.f32 %v154, %v1073
    %v1078 = vmul.f32 %v159, %v1073
    %v1079 = vmul.f32 %v164, %v1073
    %v1080 = vmul.f32 %v169, %v1073
    %1087 = vrot.lane.b32.xlu0 %v1075, 64
    %v1088 = vpop.permute.xlu0 %1087
    %1089 = vrot.lane.b32.xlu0 %v1076, 64
    %v1090 = vpop.permute.xlu0 %1089
    %1091 = vrot.lane.b32.xlu0 %v1077, 64
    %v1092 = vpop.permute.xlu0 %1091
    %1093 = vrot.lane.b32.xlu0 %v1078, 64
    %v1094 = vpop.permute.xlu0 %1093
    %1095 = vrot.lane.b32.xlu0 %v1079, 64
    %v1096 = vpop.permute.xlu0 %1095
    %1097 = vrot.lane.b32.xlu0 %v1080, 64
    %v1098 = vpop.permute.xlu0 %1097
    %v1106 = vsel %vm332, %v1065, 0
    %v1109 = vsel %vm332, %v1066, 0
    %v1112 = vsel %vm332, %v1067, 0
    %v1115 = vsel %vm332, %v1068, 0
    %v1118 = vsel %vm332, %v1069, 0
    %v1121 = vsel %vm332, %v1070, 0
    %1123 = vmatprep.subr.mxu0 0.0
    %1124 = vmatpush1.msra.mxu0 0.0
    %1125 = vmatprep.subr.mxu0 0.0
    %1126 = vmatpush1.msra.mxu0 0.0
    %1127 = vmatprep.subr.mxu0 0.0
    %1128 = vmatpush1.msra.mxu0 0.0
    %1129 = vmatprep.subr.mxu0 0.0
    %1130 = vmatpush1.msra.mxu0 0.0
    %1131 = vmatprep.subr.mxu0 0.0
    %1132 = vmatpush1.msra.mxu0 0.0
    %1133 = vmatprep.subr.mxu0 0.0
    %1134 = vmatpush1.msra.mxu0 0.0
    %1135 = vmatprep.subr.mxu0 0.0
    %1136 = vmatpush1.msra.mxu0 0.0
    %1137 = vmatprep.subr.mxu0 0.0
    %1138 = vmatpush1.msra.mxu0 0.0
    %1139 = vmatprep.subr.mxu0 0.0
    %1140 = vmatpush1.msra.mxu0 0.0
    %1141 = vmatprep.subr.mxu0 0.0
    %1142 = vmatpush1.msra.mxu0 0.0
    %1143 = vmatprep.subr.mxu0 0.0
    %1144 = vmatpush1.msra.mxu0 %v1098
    %1145 = vmatprep.subr.mxu0 0.0
    %1146 = vmatpush1.msra.mxu0 %v1096
    %1147 = vmatprep.subr.mxu0 0.0
    %1148 = vmatpush1.msra.mxu0 %v1094
    %1149 = vmatprep.subr.mxu0 0.0
    %1150 = vmatpush1.msra.mxu0 %v1092
    %1151 = vmatprep.subr.mxu0 0.0
    %1152 = vmatpush1.msra.mxu0 %v1090
    %1153 = vmatprep.subr.mxu0 0.0
    %1154 = vmatpush1.msra.mxu0 %v1088
    %1155 = vmatprep.subr.mxu0 0.0
    %1156 = vmatpush2.msra.mxu0 0.0
    %1157 = vmatprep.subr.mxu0 0.0
    %1158 = vmatpush2.msra.mxu0 0.0
    %1159 = vmatprep.subr.mxu0 0.0
    %1160 = vmatpush2.msra.mxu0 0.0
    %1161 = vmatprep.subr.mxu0 0.0
    %1162 = vmatpush2.msra.mxu0 0.0
    %1163 = vmatprep.subr.mxu0 0.0
    %1164 = vmatpush2.msra.mxu0 0.0
    %1165 = vmatprep.subr.mxu0 0.0
    %1166 = vmatpush2.msra.mxu0 0.0
    %1167 = vmatprep.subr.mxu0 0.0
    %1168 = vmatpush2.msra.mxu0 0.0
    %1169 = vmatprep.subr.mxu0 0.0
    %1170 = vmatpush2.msra.mxu0 0.0
    %1171 = vmatprep.subr.mxu0 0.0
    %1172 = vmatpush2.msra.mxu0 0.0
    %1173 = vmatprep.subr.mxu0 0.0
    %1174 = vmatpush2.msra.mxu0 0.0
    %1175 = vmatprep.subr.mxu0 0.0
    %1176 = vmatpush2.msra.mxu0 0.0
    %1177 = vmatprep.subr.mxu0 0.0
    %1178 = vmatpush2.msra.mxu0 0.0
    %1179 = vmatprep.subr.mxu0 0.0
    %1180 = vmatpush2.msra.mxu0 0.0
    %1181 = vmatprep.subr.mxu0 0.0
    %1182 = vmatpush2.msra.mxu0 0.0
    %1183 = vmatprep.subr.mxu0 0.0
    %1184 = vmatpush2.msra.mxu0 0.0
    %1185 = vmatprep.subr.mxu0 0.0
    %1186 = vmatpush2.msra.mxu0 0.0
    %1187 = vmatprep.mubr.f32.mxu0 0.0
    %1188 = vmatmul.mubr.f32.gmra.mxu0 %v1106
    %v1189 = vpop.f32.mrf.mxu0
    %v1190 = vadd.f32 0.0, %v1189
    %v1191 = vpop.f32.mrf.mxu0
    %1192 = vmatprep.mubr.f32.mxu0 0.0
    %1193 = vmatmul.mubr.f32.gmra.mxu0 %v1109
    %v1194 = vpop.f32.mrf.mxu0
    %v1195 = vadd.f32 0.0, %v1194
    %v1196 = vpop.f32.mrf.mxu0
    %1197 = vmatprep.mubr.f32.mxu0 0.0
    %1198 = vmatmul.mubr.f32.gmra.mxu0 %v1112
    %v1199 = vpop.f32.mrf.mxu0
    %v1200 = vadd.f32 0.0, %v1199
    %v1201 = vpop.f32.mrf.mxu0
    %1202 = vmatprep.mubr.f32.mxu0 0.0
    %1203 = vmatmul.mubr.f32.gmra.mxu0 %v1115
    %v1204 = vpop.f32.mrf.mxu0
    %v1205 = vadd.f32 0.0, %v1204
    %v1206 = vpop.f32.mrf.mxu0
    %1207 = vmatprep.mubr.f32.mxu0 0.0
    %1208 = vmatmul.mubr.f32.gmra.mxu0 %v1118
    %v1209 = vpop.f32.mrf.mxu0
    %v1210 = vadd.f32 0.0, %v1209
    %v1211 = vpop.f32.mrf.mxu0
    %1212 = vmatprep.mubr.f32.mxu0 0.0
    %1213 = vmatmul.mubr.f32.gmra.mxu0 %v1121
    %v1214 = vpop.f32.mrf.mxu0
    %v1215 = vadd.f32 0.0, %v1214
    %v1216 = vpop.f32.mrf.mxu0
    %1217 = vdwg.mxu0
    %v1218 = vadd.f32 %v854, %v1190
    %v1219 = vadd.f32 %v859, %v1195
    %v1220 = vadd.f32 %v864, %v1200
    %v1221 = vadd.f32 %v869, %v1205
    %v1222 = vadd.f32 %v874, %v1210
    %v1223 = vadd.f32 %v879, %v1215
    %v1224 = vlaneseq
    %v1225 = vshrl.u32 %v1224, 7
    %v1226 = vsub.s32 3, %v1225
    %v1227 = vrot.slane %v178, %v1226
    %v1228 = vmul.f32 %v144, %v1227
    %v1229 = vmul.f32 %v149, %v1227
    %v1230 = vmul.f32 %v154, %v1227
    %v1231 = vmul.f32 %v159, %v1227
    %v1232 = vmul.f32 %v164, %v1227
    %v1233 = vmul.f32 %v169, %v1227
    %v1235 = vsel %vm58, %v1228, 0
    %v1238 = vsel %vm58, %v1229, 0
    %v1241 = vsel %vm58, %v1230, 0
    %v1244 = vsel %vm58, %v1231, 0
    %v1247 = vsel %vm58, %v1232, 0
    %v1250 = vsel %vm58, %v1233, 0
    %1252 = vmatprep.subr.mxu0 0.0
    %1253 = vmatpush1.xpose.msra.mxu0 0.0
    %1254 = vmatprep.subr.mxu0 0.0
    %1255 = vmatpush1.xpose.msra.mxu0 0.0
    %1256 = vmatprep.subr.mxu0 0.0
    %1257 = vmatpush1.xpose.msra.mxu0 0.0
    %1258 = vmatprep.subr.mxu0 0.0
    %1259 = vmatpush1.xpose.msra.mxu0 0.0
    %1260 = vmatprep.subr.mxu0 0.0
    %1261 = vmatpush1.xpose.msra.mxu0 0.0
    %1262 = vmatprep.subr.mxu0 0.0
    %1263 = vmatpush1.xpose.msra.mxu0 0.0
    %1264 = vmatprep.subr.mxu0 0.0
    %1265 = vmatpush1.xpose.msra.mxu0 0.0
    %1266 = vmatprep.subr.mxu0 0.0
    %1267 = vmatpush1.xpose.msra.mxu0 0.0
    %1268 = vmatprep.subr.mxu0 0.0
    %1269 = vmatpush1.xpose.msra.mxu0 0.0
    %1270 = vmatprep.subr.mxu0 0.0
    %1271 = vmatpush1.xpose.msra.mxu0 0.0
    %1272 = vmatprep.subr.mxu0 0.0
    %1273 = vmatpush1.xpose.msra.mxu0 %v235
    %1274 = vmatprep.subr.mxu0 0.0
    %1275 = vmatpush1.xpose.msra.mxu0 %v233
    %1276 = vmatprep.subr.mxu0 0.0
    %1277 = vmatpush1.xpose.msra.mxu0 %v231
    %1278 = vmatprep.subr.mxu0 0.0
    %1279 = vmatpush1.xpose.msra.mxu0 %v229
    %1280 = vmatprep.subr.mxu0 0.0
    %1281 = vmatpush1.xpose.msra.mxu0 %v227
    %1282 = vmatprep.subr.mxu0 0.0
    %1283 = vmatpush1.xpose.msra.mxu0 %v225
    %1284 = vmatprep.subr.mxu0 0.0
    %1285 = vmatpush2.xpose.msra.mxu0 0.0
    %1286 = vmatprep.subr.mxu0 0.0
    %1287 = vmatpush2.xpose.msra.mxu0 0.0
    %1288 = vmatprep.subr.mxu0 0.0
    %1289 = vmatpush2.xpose.msra.mxu0 0.0
    %1290 = vmatprep.subr.mxu0 0.0
    %1291 = vmatpush2.xpose.msra.mxu0 0.0
    %1292 = vmatprep.subr.mxu0 0.0
    %1293 = vmatpush2.xpose.msra.mxu0 0.0
    %1294 = vmatprep.subr.mxu0 0.0
    %1295 = vmatpush2.xpose.msra.mxu0 0.0
    %1296 = vmatprep.subr.mxu0 0.0
    %1297 = vmatpush2.xpose.msra.mxu0 0.0
    %1298 = vmatprep.subr.mxu0 0.0
    %1299 = vmatpush2.xpose.msra.mxu0 0.0
    %1300 = vmatprep.subr.mxu0 0.0
    %1301 = vmatpush2.xpose.msra.mxu0 0.0
    %1302 = vmatprep.subr.mxu0 0.0
    %1303 = vmatpush2.xpose.msra.mxu0 0.0
    %1304 = vmatprep.subr.mxu0 0.0
    %1305 = vmatpush2.xpose.msra.mxu0 0.0
    %1306 = vmatprep.subr.mxu0 0.0
    %1307 = vmatpush2.xpose.msra.mxu0 0.0
    %1308 = vmatprep.subr.mxu0 0.0
    %1309 = vmatpush2.xpose.msra.mxu0 0.0
    %1310 = vmatprep.subr.mxu0 0.0
    %1311 = vmatpush2.xpose.msra.mxu0 0.0
    %1312 = vmatprep.subr.mxu0 0.0
    %1313 = vmatpush2.xpose.msra.mxu0 0.0
    %1314 = vmatprep.subr.mxu0 0.0
    %1315 = vmatpush2.xpose.msra.mxu0 0.0
    %1316 = vmatprep.mubr.f32.mxu0 0.0
    %1317 = vmatmul.mubr.f32.gmra.mxu0 %v1235
    %v1318 = vpop.f32.mrf.mxu0
    %v1319 = vadd.f32 %v172, %v1318
    %v1320 = vpop.f32.mrf.mxu0
    %1321 = vmatprep.mubr.f32.mxu0 0.0
    %1322 = vmatmul.mubr.f32.gmra.mxu0 %v1238
    %v1323 = vpop.f32.mrf.mxu0
    %v1324 = vadd.f32 %v173, %v1323
    %v1325 = vpop.f32.mrf.mxu0
    %1326 = vmatprep.mubr.f32.mxu0 0.0
    %1327 = vmatmul.mubr.f32.gmra.mxu0 %v1241
    %v1328 = vpop.f32.mrf.mxu0
    %v1329 = vadd.f32 %v174, %v1328
    %v1330 = vpop.f32.mrf.mxu0
    %1331 = vmatprep.mubr.f32.mxu0 0.0
    %1332 = vmatmul.mubr.f32.gmra.mxu0 %v1244
    %v1333 = vpop.f32.mrf.mxu0
    %v1334 = vadd.f32 %v175, %v1333
    %v1335 = vpop.f32.mrf.mxu0
    %1336 = vmatprep.mubr.f32.mxu0 0.0
    %1337 = vmatmul.mubr.f32.gmra.mxu0 %v1247
    %v1338 = vpop.f32.mrf.mxu0
    %v1339 = vadd.f32 %v176, %v1338
    %v1340 = vpop.f32.mrf.mxu0
    %1341 = vmatprep.mubr.f32.mxu0 0.0
    %1342 = vmatmul.mubr.f32.gmra.mxu0 %v1250
    %v1343 = vpop.f32.mrf.mxu0
    %v1344 = vadd.f32 %v177, %v1343
    %v1345 = vpop.f32.mrf.mxu0
    %1346 = vdwg.mxu0
    %v1347 = vsel %vm332, %v1319, -inf
    %1348 = vmax.xlane.f32.xlu0 %v1347
    %v1349 = vpop.xlane.xlu0 %1348
    %v1350 = vsel %vm332, %v1324, -inf
    %1351 = vmax.xlane.f32.xlu0 %v1350
    %v1352 = vpop.xlane.xlu0 %1351
    %v1353 = vsel %vm332, %v1329, -inf
    %1354 = vmax.xlane.f32.xlu0 %v1353
    %v1355 = vpop.xlane.xlu0 %1354
    %v1356 = vsel %vm332, %v1334, -inf
    %1357 = vmax.xlane.f32.xlu0 %v1356
    %v1358 = vpop.xlane.xlu0 %1357
    %v1359 = vsel %vm332, %v1339, -inf
    %1360 = vmax.xlane.f32.xlu0 %v1359
    %v1361 = vpop.xlane.xlu0 %1360
    %v1362 = vsel %vm332, %v1344, -inf
    %1363 = vmax.xlane.f32.xlu0 %v1362
    %v1364 = vpop.xlane.xlu0 %1363
    %v1365 = vsub.f32 %v1319, %v1349
    %v1366 = vsub.f32 %v1324, %v1352
    %v1367 = vsub.f32 %v1329, %v1355
    %v1368 = vsub.f32 %v1334, %v1358
    %v1369 = vsub.f32 %v1339, %v1361
    %v1370 = vsub.f32 %v1344, %v1364
    %v1371 = vmul.f32 %v1365, 1.442695
    %v1372 = vpow.pop %v1371
    %v1373 = vmul.f32 %v1366, 1.442695
    %v1374 = vpow.pop %v1373
    %v1375 = vmul.f32 %v1367, 1.442695
    %v1376 = vpow.pop %v1375
    %v1377 = vmul.f32 %v1368, 1.442695
    %v1378 = vpow.pop %v1377
    %v1379 = vmul.f32 %v1369, 1.442695
    %v1380 = vpow.pop %v1379
    %v1381 = vmul.f32 %v1370, 1.442695
    %v1382 = vpow.pop %v1381
    %v1383 = vsel %vm332, %v1372, 0.0
    %1384 = vadd.xlane.f32.xlu0 %v1383
    %v1385 = vpop.xlane.xlu0 %1384
    %v1386 = vsel %vm332, %v1374, 0.0
    %1387 = vadd.xlane.f32.xlu0 %v1386
    %v1388 = vpop.xlane.xlu0 %1387
    %v1389 = vsel %vm332, %v1376, 0.0
    %1390 = vadd.xlane.f32.xlu0 %v1389
    %v1391 = vpop.xlane.xlu0 %1390
    %v1392 = vsel %vm332, %v1378, 0.0
    %1393 = vadd.xlane.f32.xlu0 %v1392
    %v1394 = vpop.xlane.xlu0 %1393
    %v1395 = vsel %vm332, %v1380, 0.0
    %1396 = vadd.xlane.f32.xlu0 %v1395
    %v1397 = vpop.xlane.xlu0 %1396
    %v1398 = vsel %vm332, %v1382, 0.0
    %1399 = vadd.xlane.f32.xlu0 %v1398
    %v1400 = vpop.xlane.xlu0 %1399
    %v1401 = vrcp.pop %v1385
    %v1402 = vrcp.pop %v1388
    %v1403 = vrcp.pop %v1391
    %v1404 = vrcp.pop %v1394
    %v1405 = vrcp.pop %v1397
    %v1406 = vrcp.pop %v1400
    %v1407 = vmul.f32 %v1372, %v1401
    %v1408 = vmul.f32 %v1374, %v1402
    %v1409 = vmul.f32 %v1376, %v1403
    %v1410 = vmul.f32 %v1378, %v1404
    %v1411 = vmul.f32 %v1380, %v1405
    %v1412 = vmul.f32 %v1382, %v1406
    %1414 = vrot.lane.b32.xlu0 %v1227, 64
    %v1415 = vpop.permute.xlu0 %1414
    %v1417 = vmul.f32 %v144, %v1415
    %v1418 = vmul.f32 %v149, %v1415
    %v1419 = vmul.f32 %v154, %v1415
    %v1420 = vmul.f32 %v159, %v1415
    %v1421 = vmul.f32 %v164, %v1415
    %v1422 = vmul.f32 %v169, %v1415
    %1429 = vrot.lane.b32.xlu0 %v1417, 64
    %v1430 = vpop.permute.xlu0 %1429
    %1431 = vrot.lane.b32.xlu0 %v1418, 64
    %v1432 = vpop.permute.xlu0 %1431
    %1433 = vrot.lane.b32.xlu0 %v1419, 64
    %v1434 = vpop.permute.xlu0 %1433
    %1435 = vrot.lane.b32.xlu0 %v1420, 64
    %v1436 = vpop.permute.xlu0 %1435
    %1437 = vrot.lane.b32.xlu0 %v1421, 64
    %v1438 = vpop.permute.xlu0 %1437
    %1439 = vrot.lane.b32.xlu0 %v1422, 64
    %v1440 = vpop.permute.xlu0 %1439
    %v1448 = vsel %vm332, %v1407, 0
    %v1451 = vsel %vm332, %v1408, 0
    %v1454 = vsel %vm332, %v1409, 0
    %v1457 = vsel %vm332, %v1410, 0
    %v1460 = vsel %vm332, %v1411, 0
    %v1463 = vsel %vm332, %v1412, 0
    %1465 = vmatprep.subr.mxu0 0.0
    %1466 = vmatpush1.msra.mxu0 0.0
    %1467 = vmatprep.subr.mxu0 0.0
    %1468 = vmatpush1.msra.mxu0 0.0
    %1469 = vmatprep.subr.mxu0 0.0
    %1470 = vmatpush1.msra.mxu0 0.0
    %1471 = vmatprep.subr.mxu0 0.0
    %1472 = vmatpush1.msra.mxu0 0.0
    %1473 = vmatprep.subr.mxu0 0.0
    %1474 = vmatpush1.msra.mxu0 0.0
    %1475 = vmatprep.subr.mxu0 0.0
    %1476 = vmatpush1.msra.mxu0 0.0
    %1477 = vmatprep.subr.mxu0 0.0
    %1478 = vmatpush1.msra.mxu0 0.0
    %1479 = vmatprep.subr.mxu0 0.0
    %1480 = vmatpush1.msra.mxu0 0.0
    %1481 = vmatprep.subr.mxu0 0.0
    %1482 = vmatpush1.msra.mxu0 0.0
    %1483 = vmatprep.subr.mxu0 0.0
    %1484 = vmatpush1.msra.mxu0 0.0
    %1485 = vmatprep.subr.mxu0 0.0
    %1486 = vmatpush1.msra.mxu0 %v1440
    %1487 = vmatprep.subr.mxu0 0.0
    %1488 = vmatpush1.msra.mxu0 %v1438
    %1489 = vmatprep.subr.mxu0 0.0
    %1490 = vmatpush1.msra.mxu0 %v1436
    %1491 = vmatprep.subr.mxu0 0.0
    %1492 = vmatpush1.msra.mxu0 %v1434
    %1493 = vmatprep.subr.mxu0 0.0
    %1494 = vmatpush1.msra.mxu0 %v1432
    %1495 = vmatprep.subr.mxu0 0.0
    %1496 = vmatpush1.msra.mxu0 %v1430
    %1497 = vmatprep.subr.mxu0 0.0
    %1498 = vmatpush2.msra.mxu0 0.0
    %1499 = vmatprep.subr.mxu0 0.0
    %1500 = vmatpush2.msra.mxu0 0.0
    %1501 = vmatprep.subr.mxu0 0.0
    %1502 = vmatpush2.msra.mxu0 0.0
    %1503 = vmatprep.subr.mxu0 0.0
    %1504 = vmatpush2.msra.mxu0 0.0
    %1505 = vmatprep.subr.mxu0 0.0
    %1506 = vmatpush2.msra.mxu0 0.0
    %1507 = vmatprep.subr.mxu0 0.0
    %1508 = vmatpush2.msra.mxu0 0.0
    %1509 = vmatprep.subr.mxu0 0.0
    %1510 = vmatpush2.msra.mxu0 0.0
    %1511 = vmatprep.subr.mxu0 0.0
    %1512 = vmatpush2.msra.mxu0 0.0
    %1513 = vmatprep.subr.mxu0 0.0
    %1514 = vmatpush2.msra.mxu0 0.0
    %1515 = vmatprep.subr.mxu0 0.0
    %1516 = vmatpush2.msra.mxu0 0.0
    %1517 = vmatprep.subr.mxu0 0.0
    %1518 = vmatpush2.msra.mxu0 0.0
    %1519 = vmatprep.subr.mxu0 0.0
    %1520 = vmatpush2.msra.mxu0 0.0
    %1521 = vmatprep.subr.mxu0 0.0
    %1522 = vmatpush2.msra.mxu0 0.0
    %1523 = vmatprep.subr.mxu0 0.0
    %1524 = vmatpush2.msra.mxu0 0.0
    %1525 = vmatprep.subr.mxu0 0.0
    %1526 = vmatpush2.msra.mxu0 0.0
    %1527 = vmatprep.subr.mxu0 0.0
    %1528 = vmatpush2.msra.mxu0 0.0
    %1529 = vmatprep.mubr.f32.mxu0 0.0
    %1530 = vmatmul.mubr.f32.gmra.mxu0 %v1448
    %v1531 = vpop.f32.mrf.mxu0
    %v1532 = vadd.f32 0.0, %v1531
    %v1533 = vpop.f32.mrf.mxu0
    %1534 = vmatprep.mubr.f32.mxu0 0.0
    %1535 = vmatmul.mubr.f32.gmra.mxu0 %v1451
    %v1536 = vpop.f32.mrf.mxu0
    %v1537 = vadd.f32 0.0, %v1536
    %v1538 = vpop.f32.mrf.mxu0
    %1539 = vmatprep.mubr.f32.mxu0 0.0
    %1540 = vmatmul.mubr.f32.gmra.mxu0 %v1454
    %v1541 = vpop.f32.mrf.mxu0
    %v1542 = vadd.f32 0.0, %v1541
    %v1543 = vpop.f32.mrf.mxu0
    %1544 = vmatprep.mubr.f32.mxu0 0.0
    %1545 = vmatmul.mubr.f32.gmra.mxu0 %v1457
    %v1546 = vpop.f32.mrf.mxu0
    %v1547 = vadd.f32 0.0, %v1546
    %v1548 = vpop.f32.mrf.mxu0
    %1549 = vmatprep.mubr.f32.mxu0 0.0
    %1550 = vmatmul.mubr.f32.gmra.mxu0 %v1460
    %v1551 = vpop.f32.mrf.mxu0
    %v1552 = vadd.f32 0.0, %v1551
    %v1553 = vpop.f32.mrf.mxu0
    %1554 = vmatprep.mubr.f32.mxu0 0.0
    %1555 = vmatmul.mubr.f32.gmra.mxu0 %v1463
    %v1556 = vpop.f32.mrf.mxu0
    %v1557 = vadd.f32 0.0, %v1556
    %v1558 = vpop.f32.mrf.mxu0
    %1559 = vdwg.mxu0
    %v1560 = vadd.f32 %v1218, %v1532
    %v1561 = vadd.f32 %v1219, %v1537
    %v1562 = vadd.f32 %v1220, %v1542
    %v1563 = vadd.f32 %v1221, %v1547
    %v1564 = vadd.f32 %v1222, %v1552
    %v1565 = vadd.f32 %v1223, %v1557
    %v1566 = vadd.f32 %v1560, %v1562
    %v1567 = vadd.f32 %v1561, %v1563
    %v1568 = vadd.f32 %v1566, %v1564
    %v1569 = vadd.f32 %v1567, %v1565
    %v1570 = vmul.f32 %v1568, 0.33333334
    %v1571 = vmul.f32 %v1569, 0.33333334
    %v1572 = vld [vmem:[#allocation2] sm:$0xff]
    %v1573 = vld [vmem:[#allocation2 + $0x8] sm:$0xff]
    %v1574 = vld [vmem:[#allocation2 + $0x10] sm:$0xff]
    %v1575 = vld [vmem:[#allocation2 + $0x18] sm:$0xff]
    %v1576 = vld [vmem:[%s4] sm:$0x1]
    %v1578 = vlaneseq
    %v1579 = vshrl.u32 %v1578, 7
    %v1580 = vsub.s32 0, %v1579
    %v1581 = vrot.slane %v1576, %v1580
    %v1584 = vsel %vm58, %v1570, 0
    %v1587 = vsel %vm58, %v1571, 0
    %1589 = vmatprep.subr.mxu0 0.0
    %1590 = vmatpush1.msra.mxu0 0.0
    %1591 = vmatprep.subr.mxu0 0.0
    %1592 = vmatpush1.msra.mxu0 0.0
    %1593 = vmatprep.subr.mxu0 0.0
    %1594 = vmatpush1.msra.mxu0 0.0
    %1595 = vmatprep.subr.mxu0 0.0
    %1596 = vmatpush1.msra.mxu0 0.0
    %1597 = vmatprep.subr.mxu0 0.0
    %1598 = vmatpush1.msra.mxu0 0.0
    %1599 = vmatprep.subr.mxu0 0.0
    %1600 = vmatpush1.msra.mxu0 0.0
    %1601 = vmatprep.subr.mxu0 0.0
    %1602 = vmatpush1.msra.mxu0 0.0
    %1603 = vmatprep.subr.mxu0 0.0
    %1604 = vmatpush1.msra.mxu0 0.0
    %1605 = vmatprep.subr.mxu0 0.0
    %1606 = vmatpush1.msra.mxu0 0.0
    %1607 = vmatprep.subr.mxu0 0.0
    %1608 = vmatpush1.msra.mxu0 0.0
    %1609 = vmatprep.subr.mxu0 0.0
    %1610 = vmatpush1.msra.mxu0 0.0
    %1611 = vmatprep.subr.mxu0 0.0
    %1612 = vmatpush1.msra.mxu0 0.0
    %1613 = vmatprep.subr.mxu0 0.0
    %1614 = vmatpush1.msra.mxu0 %v1575
    %1615 = vmatprep.subr.mxu0 0.0
    %1616 = vmatpush1.msra.mxu0 %v1574
    %1617 = vmatprep.subr.mxu0 0.0
    %1618 = vmatpush1.msra.mxu0 %v1573
    %1619 = vmatprep.subr.mxu0 0.0
    %1620 = vmatpush1.msra.mxu0 %v1572
    %1621 = vmatprep.subr.mxu0 0.0
    %1622 = vmatpush2.msra.mxu0 0.0
    %1623 = vmatprep.subr.mxu0 0.0
    %1624 = vmatpush2.msra.mxu0 0.0
    %1625 = vmatprep.subr.mxu0 0.0
    %1626 = vmatpush2.msra.mxu0 0.0
    %1627 = vmatprep.subr.mxu0 0.0
    %1628 = vmatpush2.msra.mxu0 0.0
    %1629 = vmatprep.subr.mxu0 0.0
    %1630 = vmatpush2.msra.mxu0 0.0
    %1631 = vmatprep.subr.mxu0 0.0
    %1632 = vmatpush2.msra.mxu0 0.0
    %1633 = vmatprep.subr.mxu0 0.0
    %1634 = vmatpush2.msra.mxu0 0.0
    %1635 = vmatprep.subr.mxu0 0.0
    %1636 = vmatpush2.msra.mxu0 0.0
    %1637 = vmatprep.subr.mxu0 0.0
    %1638 = vmatpush2.msra.mxu0 0.0
    %1639 = vmatprep.subr.mxu0 0.0
    %1640 = vmatpush2.msra.mxu0 0.0
    %1641 = vmatprep.subr.mxu0 0.0
    %1642 = vmatpush2.msra.mxu0 0.0
    %1643 = vmatprep.subr.mxu0 0.0
    %1644 = vmatpush2.msra.mxu0 0.0
    %1645 = vmatprep.subr.mxu0 0.0
    %1646 = vmatpush2.msra.mxu0 0.0
    %1647 = vmatprep.subr.mxu0 0.0
    %1648 = vmatpush2.msra.mxu0 0.0
    %1649 = vmatprep.subr.mxu0 0.0
    %1650 = vmatpush2.msra.mxu0 0.0
    %1651 = vmatprep.subr.mxu0 0.0
    %1652 = vmatpush2.msra.mxu0 0.0
    %1653 = vmatprep.mubr.f32.mxu0 0.0
    %1654 = vmatmul.mubr.f32.gmra.mxu0 %v1584
    %v1655 = vpop.f32.mrf.mxu0
    %v1656 = vadd.f32 %v1581, %v1655
    %v1657 = vpop.f32.mrf.mxu0
    %1658 = vmatprep.mubr.f32.mxu0 0.0
    %1659 = vmatmul.mubr.f32.gmra.mxu0 %v1587
    %v1660 = vpop.f32.mrf.mxu0
    %v1661 = vadd.f32 %v1581, %v1660
    %v1662 = vpop.f32.mrf.mxu0
    %1663 = vdwg.mxu0
    %1664 = vst.msk [vmem:[#allocation5] sm:$0xff] %vm58, %v1656
    %1665 = vst.msk [vmem:[#allocation5 + $0x8] sm:$0xff] %vm58, %v1661
    // Predicated region
    $region34: #{tpu_custom_call.1} parent=1 // pred_check
      _
    $region35: #{tpu_custom_call.1} parent=1 // pred_check_branch
      %1667 = sbr.rel (0) target = $region37
    $region36: #{tpu_custom_call.1} parent=1 // pred_region
      %s1669 = ssub.s32 256, 256
      %1670 = vsyncadd [#allocation4], %s1669
      %s1671 = sshll.u32 [#allocation5], 4
      %s1672 = int_to_ptr.vmem [resolvable:$true] %s1671
      %1677 = dma.vmem_to_hbm [thread:$0]  %s1672, 256, %s7, [#allocation4], 128, 128, 8
    $region37: #{tpu_custom_call.1} parent=1 // pred_fallthru
      _
    // Predicated region
    $region38: #{tpu_custom_call.1} parent=1 // pred_check
      _
    $region39: #{tpu_custom_call.1} parent=1 // pred_check_branch
      %1679 = sbr.rel (0) target = $region41
    $region40: #{tpu_custom_call.1} parent=1 // pred_region
      %1680 = dma.done [#allocation4], 256
    $region41: #{tpu_custom_call.1} parent=1 // pred_fallthru
      _
    %1681 = vsyncpa [#allocation3], 1
    %1682 = vsyncpa [#allocation4], 1

</llo_original>
